<compile_context>
chip_gen: v7x
topology: tpu7x:2x2x1
jax: 0.10.0
libtpu: 0.0.40
codegen_flags: <defaults>
</compile_context>

<pallas_src>
import functools

import jax
import jax.numpy as jnp
from jax import lax
from jax.experimental import pallas as pl
from jax.experimental.pallas import tpu as pltpu

_EPS = 1e-5        # PyTorch BatchNorm default eps
_NEG_BIG = -1e30   # logit value for padded output lanes (exp underflows to 0)
_OUT_PAD = 128     # lane-dense output width


# ---------------------------------------------------------------------------
# Offline (weight-side only) matrix builders — run once in the wrapper.
# ---------------------------------------------------------------------------
def _conv_as_matmul(wts, h, w):
    """Conv2d(k=3, s=1, p=1) on a lane-dense channel-major flattened image as a
    single matrix:  out_flat = in_flat @ M,  M: (Cin*h*w, Cout*h*w).
    Lane index inside a channel segment is y*w + x (row-major)."""
    c_out, c_in = int(wts.shape[0]), int(wts.shape[1])
    hw = h * w
    j = jnp.arange(hw)
    y, x = j // w, j % w
    rows = jnp.arange(hw)[:, None]
    m = jnp.zeros((c_in * hw, c_out * hw), jnp.float32)
    for dy in (-1, 0, 1):
        for dx in (-1, 0, 1):
            yy, xx = y + dy, x + dx
            valid = (yy >= 0) & (yy < h) & (xx >= 0) & (xx < w)
            src = jnp.clip(yy, 0, h - 1) * w + jnp.clip(xx, 0, w - 1)
            # sel[i, j] = 1 iff input pixel i is the (dy, dx) neighbour of output pixel j
            sel = ((rows == src[None, :]) & valid[None, :]).astype(jnp.float32)
            wk = wts[:, :, dy + 1, dx + 1].astype(jnp.float32)          # (Cout, Cin)
            blk = wk.T[:, None, :, None] * sel[None, :, None, :]        # (Cin, hw, Cout, hw)
            m = m + blk.reshape(c_in * hw, c_out * hw)
    return m


def _pool_select_dense(c, h, w):
    """(c*h*w, c*(h//2)*(w//2)) 0/1 matrix picking the even-(y, x) lane of each
    channel segment and packing to channel-major pooled order (PyTorch flatten)."""
    hw = h * w
    h2, w2 = h // 2, w // 2
    hwp = h2 * w2
    l = jnp.arange(hw)
    y, x = l // w, l % w
    dst = (y // 2) * w2 + (x // 2)
    keep = (y % 2 == 0) & (x % 2 == 0)
    base = ((dst[:, None] == jnp.arange(hwp)[None, :]) & keep[:, None]).astype(jnp.float32)
    m = jnp.zeros((c * hw, c * hwp), jnp.float32)
    for ci in range(c):
        m = m.at[ci * hw:(ci + 1) * hw, ci * hwp:(ci + 1) * hwp].set(base)
    return m


# ---------------------------------------------------------------------------
# The kernel: full forward pass for one tile of B samples.
# ---------------------------------------------------------------------------
def _cnn_kernel(x_ref, w1_ref, b1_ref, q_ref, b2_ref, wt_ref, bt_ref, out_ref,
                *, row1, row2, mxu_dtype):
    f32 = jnp.float32

    def pool_pre_max(a, row_stride):
        # After this, every lane with even (y, x) holds the max of its 2x2 block.
        # Other lanes are don't-care: the next matmul's 0/1 select rows only read
        # the even-even lanes, and roll wrap-around / segment crossings only ever
        # pollute odd lanes.  pltpu.roll -> XLU rotate slot (free vs. the VPU).
        n = a.shape[1]
        m = jnp.maximum(a, pltpu.roll(a, shift=n - 1, axis=1))           # pair along x
        return jnp.maximum(m, pltpu.roll(m, shift=n - row_stride, axis=1))  # then along y

    # Conv1 + BN (folded) + ReLU — one MXU matmul into lane-dense channel segments.
    x = x_ref[...].astype(mxu_dtype)
    h1 = jnp.dot(x, w1_ref[...], preferred_element_type=f32) + b1_ref[...]
    h1 = jnp.maximum(h1, 0.0)

    # MaxPool1-select + Conv2 + BN (folded) fused into one matrix Q; then ReLU.
    m1 = pool_pre_max(h1, row1).astype(mxu_dtype)
    h2 = jnp.dot(m1, q_ref[...], preferred_element_type=f32) + b2_ref[...]
    h2 = jnp.maximum(h2, 0.0)

    # MaxPool2-select + Flatten + Linear + Linear fused into one (lane-padded) matrix.
    m2 = pool_pre_max(h2, row2).astype(mxu_dtype)
    logits = jnp.dot(m2, wt_ref[...], preferred_element_type=f32) + bt_ref[...]

    # LogSoftmax over the valid classes (padded lanes carry -1e30 -> exp == 0).
    zmax = jnp.max(logits, axis=1, keepdims=True)
    z = logits - zmax
    lse = jnp.log(jnp.sum(jnp.exp(z), axis=1, keepdims=True))
    out_ref[...] = (z - lse).astype(out_ref.dtype)


# ---------------------------------------------------------------------------
# Wrapper: BN folding, conv->matmul folding, FC fusion (all weight-side glue),
# then one pallas_call over the batch grid.
# ---------------------------------------------------------------------------
def cnn_forward(x, params, *, b_tile=256, mxu_dtype=jnp.bfloat16):
    N, cin, H, W = x.shape
    assert cin == 1 and H % 4 == 0 and W % 4 == 0
    C1 = params["conv1_w"].shape[0]
    C2 = params["conv2_w"].shape[0]
    nclass = params["fc2_w"].shape[0]
    H2, W2 = H // 2, W // 2
    f32 = jnp.float32

    # --- fold BatchNorm (eval mode) into the conv weights / biases ---
    s1 = params["bn1_gamma"] / jnp.sqrt(params["bn1_var"] + _EPS)
    t1 = params["bn1_beta"] - params["bn1_mean"] * s1
    s2 = params["bn2_gamma"] / jnp.sqrt(params["bn2_var"] + _EPS)
    t2 = params["bn2_beta"] - params["bn2_mean"] * s2
    w1f = params["conv1_w"] * s1[:, None, None, None]
    b1f = (params["conv1_b"] * s1 + t1).astype(f32)
    w2f = params["conv2_w"] * s2[:, None, None, None]
    b2f = (params["conv2_b"] * s2 + t2).astype(f32)

    # --- fold the whole linear structure into three matrices ---
    w1big = _conv_as_matmul(w1f, H, W)                       # (H*W, C1*H*W)
    psel1 = _pool_select_dense(C1, H, W)                     # (C1*H*W, C1*H2*W2)
    w2big = _conv_as_matmul(w2f, H2, W2)                     # (C1*H2*W2, C2*H2*W2)
    q = psel1 @ w2big                                        # pool1-select + conv2
    psel2 = _pool_select_dense(C2, H2, W2)                   # (C2*H2*W2, C2*H4*W4)
    wtail = psel2 @ params["fc1_w"].T.astype(f32) @ params["fc2_w"].T.astype(f32)
    btail = params["fc1_b"] @ params["fc2_w"].T + params["fc2_b"]

    lanes1 = C1 * H * W
    lanes2 = C2 * H2 * W2
    wtail_p = jnp.zeros((lanes2, _OUT_PAD), f32).at[:, :nclass].set(wtail)
    btail_p = jnp.full((1, _OUT_PAD), _NEG_BIG, f32).at[0, :nclass].set(btail.astype(f32))
    b1row = jnp.repeat(b1f, H * W)[None, :]                  # (1, lanes1)
    b2row = jnp.repeat(b2f, H2 * W2)[None, :]                # (1, lanes2)

    w1m = w1big.astype(mxu_dtype)
    qm = q.astype(mxu_dtype)
    wtm = wtail_p.astype(mxu_dtype)

    # --- batch tiling (lane = y*W + x, one sample per sublane row) ---
    xf = x.reshape(N, H * W).astype(f32)
    # Large tiles amortize the ~600-cycle per-step overhead; clamp to the padded
    # batch so tiny batches don't pay for dead rows.  (On v7x cap b_tile <= 256
    # and keep >= 2 grid steps so the "parallel" axis can use both TensorCores.)
    b_tile = max(8, (min(int(b_tile), pl.cdiv(N, 8) * 8) // 8) * 8)
    n_pad = pl.cdiv(N, b_tile) * b_tile
    if n_pad != N:
        xf = jnp.concatenate([xf, jnp.zeros((n_pad - N, H * W), f32)], axis=0)

    const = lambda shape: pl.BlockSpec(shape, lambda g: (0, 0))
    kernel = functools.partial(_cnn_kernel, row1=W, row2=W2, mxu_dtype=mxu_dtype)

    out = pl.pallas_call(
        kernel,
        out_shape=jax.ShapeDtypeStruct((n_pad, _OUT_PAD), f32),
        grid=(n_pad // b_tile,),
        in_specs=[
            pl.BlockSpec((b_tile, H * W), lambda g: (g, 0)),   # x tile
            const((H * W, lanes1)),                            # conv1 (+BN) as matmul
            const((1, lanes1)),                                # conv1 bias row
            const((lanes1, lanes2)),                           # pool1-select + conv2 (+BN)
            const((1, lanes2)),                                # conv2 bias row
            const((lanes2, _OUT_PAD)),                         # pool2 + flatten + fc1 + fc2
            const((1, _OUT_PAD)),                              # fused fc bias (lane-padded)
        ],
        out_specs=pl.BlockSpec((b_tile, _OUT_PAD), lambda g: (g, 0)),
        compiler_params=pltpu.CompilerParams(
            dimension_semantics=("parallel",)),
    )(xf, w1m, b1row, qm, b2row, wtm, btail_p)
    return out[:N, :nclass]


# ---------------------------------------------------------------------------
# Pure-JAX reference (mirrors the PyTorch forward, BN in eval mode).
# ---------------------------------------------------------------------------
def cnn_reference(x, params):
    dn = ("NCHW", "OIHW", "NCHW")

    def block(y, w, b, gamma, beta, mean, var):
        y = lax.conv_general_dilated(y, w, (1, 1), "SAME", dimension_numbers=dn)
        y = y + b[None, :, None, None]
        y = (y - mean[None, :, None, None]) / jnp.sqrt(var + _EPS)[None, :, None, None]
        y = y * gamma[None, :, None, None] + beta[None, :, None, None]
        y = jnp.maximum(y, 0.0)
        return lax.reduce_window(y, -jnp.inf, lax.max,
                                 (1, 1, 2, 2), (1, 1, 2, 2), "VALID")

    y = block(x, params["conv1_w"], params["conv1_b"], params["bn1_gamma"],
              params["bn1_beta"], params["bn1_mean"], params["bn1_var"])
    y = block(y, params["conv2_w"], params["conv2_b"], params["bn2_gamma"],
              params["bn2_beta"], params["bn2_mean"], params["bn2_var"])
    flat = y.reshape(y.shape[0], -1)
    h1 = flat @ params["fc1_w"].T + params["fc1_b"]
    h2 = h1 @ params["fc2_w"].T + params["fc2_b"]
    return jax.nn.log_softmax(h2, axis=1)


# ---------------------------------------------------------------------------
# Deterministic synthetic parameters (shapes from CNNArchitecture.__init__).
# ---------------------------------------------------------------------------
def init_params(key, img_w, img_h):
    n_filters, hidden, nclass = 4, 32, 2
    fc_in = n_filters * (img_w // 4) * (img_h // 4)
    ks = jax.random.split(key, 16)
    nrm = lambda k, s, scale: scale * jax.random.normal(k, s, jnp.float32)
    return {
        "conv1_w": nrm(ks[0], (n_filters, 1, 3, 3), 0.3),
        "conv1_b": nrm(ks[1], (n_filters,), 0.1),
        "bn1_gamma": 1.0 + nrm(ks[2], (n_filters,), 0.1),
        "bn1_beta": nrm(ks[3], (n_filters,), 0.1),
        "bn1_mean": nrm(ks[4], (n_filters,), 0.05),
        "bn1_var": 1.0 + jnp.abs(nrm(ks[5], (n_filters,), 0.1)),
        "conv2_w": nrm(ks[6], (n_filters, n_filters, 3, 3), 0.2),
        "conv2_b": nrm(ks[7], (n_filters,), 0.1),
        "bn2_gamma": 1.0 + nrm(ks[8], (n_filters,), 0.1),
        "bn2_beta": nrm(ks[9], (n_filters,), 0.1),
        "bn2_mean": nrm(ks[10], (n_filters,), 0.05),
        "bn2_var": 1.0 + jnp.abs(nrm(ks[11], (n_filters,), 0.1)),
        "fc1_w": nrm(ks[12], (hidden, fc_in), 0.1),
        "fc1_b": nrm(ks[13], (hidden,), 0.1),
        "fc2_w": nrm(ks[14], (nclass, hidden), 0.1),
        "fc2_b": nrm(ks[15], (nclass,), 0.1),
    }


if __name__ == "__main__":
    img_w = img_h = 16
    batch = 12          # not a multiple of 8 -> exercises the batch-padding path
    key = jax.random.PRNGKey(0)
    kx, kp = jax.random.split(key)
    params = init_params(kp, img_w, img_h)
    x = jax.random.normal(kx, (batch, 1, img_h, img_w), jnp.float32)

    ref = cnn_reference(x, params)

    # Default path: single large tile (b_tile auto-clamped to the padded batch).
    out = cnn_forward(x, params)
    jax.block_until_ready(out)
    assert out.shape == (batch, 2), out.shape
    err = float(jnp.max(jnp.abs(out - ref)))

    # Multi-step grid + padding path (b_tile does not divide the batch).
    out2 = cnn_forward(x, params, b_tile=8)
    jax.block_until_ready(out2)
    err2 = float(jnp.max(jnp.abs(out2 - ref)))

    # Tolerance accounts for bf16 MXU operands (f32 accumulate) in the kernel and
    # the TPU's default reduced-precision f32 matmul/conv passes in the reference;
    # structural bugs would show up as errors >> 1e-1.
    tol = 3e-2
    assert err < tol and err2 < tol, (err, err2)
    print("KERNEL_OK")
</pallas_src>

<mosaic_0001>
module attributes {stable_mosaic.version = 11 : i64} {
  func.func @_cnn_kernel(%arg0: i32, %arg1: memref<16x256xf32, #tpu.memory_space<vmem>>, %arg2: memref<256x1024xbf16, #tpu.memory_space<vmem>>, %arg3: memref<1x1024xf32, #tpu.memory_space<vmem>>, %arg4: memref<1024x256xbf16, #tpu.memory_space<vmem>>, %arg5: memref<1x256xf32, #tpu.memory_space<vmem>>, %arg6: memref<256x128xbf16, #tpu.memory_space<vmem>>, %arg7: memref<1x128xf32, #tpu.memory_space<vmem>>, %arg8: memref<16x128xf32, #tpu.memory_space<vmem>>) attributes {dimension_semantics = [#tpu.dimension_semantics<parallel>], iteration_bounds = array<i64: 1>, scalar_prefetch = 0 : i64, scratch_operands = 0 : i64, tpu.core_type = #tpu.core_type<tc>, window_params = [{transform_indices = @transform_0, window_bounds = array<i64: 16, 256>}, {pipeline_mode = #tpu.pipeline_mode<synchronous>, transform_indices = @transform_1, window_bounds = array<i64: 256, 1024>}, {pipeline_mode = #tpu.pipeline_mode<synchronous>, transform_indices = @transform_2, window_bounds = array<i64: 1, 1024>}, {pipeline_mode = #tpu.pipeline_mode<synchronous>, transform_indices = @transform_3, window_bounds = array<i64: 1024, 256>}, {pipeline_mode = #tpu.pipeline_mode<synchronous>, transform_indices = @transform_4, window_bounds = array<i64: 1, 256>}, {pipeline_mode = #tpu.pipeline_mode<synchronous>, transform_indices = @transform_5, window_bounds = array<i64: 256, 128>}, {pipeline_mode = #tpu.pipeline_mode<synchronous>, transform_indices = @transform_6, window_bounds = array<i64: 1, 128>}, {transform_indices = @transform_7, window_bounds = array<i64: 16, 128>}]} {
    %c0 = arith.constant 0 : index
    %c0_0 = arith.constant 0 : index
    %0 = vector.load %arg1[%c0, %c0_0] : memref<16x256xf32, #tpu.memory_space<vmem>>, vector<16x256xf32>
    %1 = arith.truncf %0 : vector<16x256xf32> to vector<16x256xbf16>
    %c0_1 = arith.constant 0 : index
    %c0_2 = arith.constant 0 : index
    %2 = vector.load %arg2[%c0_1, %c0_2] : memref<256x1024xbf16, #tpu.memory_space<vmem>>, vector<256x1024xbf16>
    %cst = arith.constant dense<0.000000e+00> : vector<16x1024xf32>
    %3 = tpu.matmul %1, %2, %cst {dimension_numbers = #tpu.dot_dimension_numbers<[1], [0], [0], [1], [0, 0, 1, 1], [], []>} : vector<16x256xbf16>, vector<256x1024xbf16>, vector<16x1024xf32> -> vector<16x1024xf32>
    %c0_3 = arith.constant 0 : index
    %c0_4 = arith.constant 0 : index
    %4 = vector.load %arg3[%c0_3, %c0_4] : memref<1x1024xf32, #tpu.memory_space<vmem>>, vector<1x1024xf32>
    %5 = vector.broadcast %4 : vector<1x1024xf32> to vector<16x1024xf32>
    %6 = arith.addf %3, %5 : vector<16x1024xf32>
    %cst_5 = arith.constant 0.000000e+00 : f32
    %7 = vector.broadcast %cst_5 : f32 to vector<16x1024xf32>
    %8 = arith.maximumf %6, %7 : vector<16x1024xf32>
    %c1023_i32 = arith.constant 1023 : i32
    %9 = tpu.dynamic_rotate %8 by %c1023_i32 dim 1 : vector<16x1024xf32>, i32 -> vector<16x1024xf32>
    %10 = arith.maximumf %8, %9 : vector<16x1024xf32>
    %c1008_i32 = arith.constant 1008 : i32
    %11 = tpu.dynamic_rotate %10 by %c1008_i32 dim 1 : vector<16x1024xf32>, i32 -> vector<16x1024xf32>
    %12 = arith.maximumf %10, %11 : vector<16x1024xf32>
    %13 = arith.truncf %12 : vector<16x1024xf32> to vector<16x1024xbf16>
    %c0_6 = arith.constant 0 : index
    %c0_7 = arith.constant 0 : index
    %14 = vector.load %arg4[%c0_6, %c0_7] : memref<1024x256xbf16, #tpu.memory_space<vmem>>, vector<1024x256xbf16>
    %cst_8 = arith.constant dense<0.000000e+00> : vector<16x256xf32>
    %15 = tpu.matmul %13, %14, %cst_8 {dimension_numbers = #tpu.dot_dimension_numbers<[1], [0], [0], [1], [0, 0, 1, 1], [], []>} : vector<16x1024xbf16>, vector<1024x256xbf16>, vector<16x256xf32> -> vector<16x256xf32>
    %c0_9 = arith.constant 0 : index
    %c0_10 = arith.constant 0 : index
    %16 = vector.load %arg5[%c0_9, %c0_10] : memref<1x256xf32, #tpu.memory_space<vmem>>, vector<1x256xf32>
    %17 = vector.broadcast %16 : vector<1x256xf32> to vector<16x256xf32>
    %18 = arith.addf %15, %17 : vector<16x256xf32>
    %cst_11 = arith.constant 0.000000e+00 : f32
    %19 = vector.broadcast %cst_11 : f32 to vector<16x256xf32>
    %20 = arith.maximumf %18, %19 : vector<16x256xf32>
    %c255_i32 = arith.constant 255 : i32
    %21 = tpu.dynamic_rotate %20 by %c255_i32 dim 1 : vector<16x256xf32>, i32 -> vector<16x256xf32>
    %22 = arith.maximumf %20, %21 : vector<16x256xf32>
    %c248_i32 = arith.constant 248 : i32
    %23 = tpu.dynamic_rotate %22 by %c248_i32 dim 1 : vector<16x256xf32>, i32 -> vector<16x256xf32>
    %24 = arith.maximumf %22, %23 : vector<16x256xf32>
    %25 = arith.truncf %24 : vector<16x256xf32> to vector<16x256xbf16>
    %c0_12 = arith.constant 0 : index
    %c0_13 = arith.constant 0 : index
    %26 = vector.load %arg6[%c0_12, %c0_13] : memref<256x128xbf16, #tpu.memory_space<vmem>>, vector<256x128xbf16>
    %cst_14 = arith.constant dense<0.000000e+00> : vector<16x128xf32>
    %27 = tpu.matmul %25, %26, %cst_14 {dimension_numbers = #tpu.dot_dimension_numbers<[1], [0], [0], [1], [0, 0, 1, 1], [], []>} : vector<16x256xbf16>, vector<256x128xbf16>, vector<16x128xf32> -> vector<16x128xf32>
    %c0_15 = arith.constant 0 : index
    %c0_16 = arith.constant 0 : index
    %28 = vector.load %arg7[%c0_15, %c0_16] : memref<1x128xf32, #tpu.memory_space<vmem>>, vector<1x128xf32>
    %29 = vector.broadcast %28 : vector<1x128xf32> to vector<16x128xf32>
    %30 = arith.addf %27, %29 : vector<16x128xf32>
    %cst_17 = arith.constant dense<0xFF800000> : vector<16xf32>
    %31 = vector.multi_reduction <maximumf>, %30, %cst_17 [1] : vector<16x128xf32> to vector<16xf32>
    %32 = vector.shape_cast %31 : vector<16xf32> to vector<16x1xf32>
    %33 = vector.broadcast %32 : vector<16x1xf32> to vector<16x128xf32>
    %34 = arith.subf %30, %33 : vector<16x128xf32>
    %35 = math.exp %34 : vector<16x128xf32>
    %cst_18 = arith.constant dense<0.000000e+00> : vector<16xf32>
    %36 = vector.multi_reduction <add>, %35, %cst_18 [1] : vector<16x128xf32> to vector<16xf32>
    %37 = vector.shape_cast %36 : vector<16xf32> to vector<16x1xf32>
    %38 = math.log %37 : vector<16x1xf32>
    %39 = vector.broadcast %38 : vector<16x1xf32> to vector<16x128xf32>
    %40 = arith.subf %34, %39 : vector<16x128xf32>
    %c0_19 = arith.constant 0 : index
    %c0_20 = arith.constant 0 : index
    %41 = vector.load %arg8[%c0_19, %c0_20] : memref<16x128xf32, #tpu.memory_space<vmem>>, vector<16x128xf32>
    tpu.vector_store %arg8[%c0_19, %c0_20], %40 {strides = array<i32>} : memref<16x128xf32, #tpu.memory_space<vmem>>, vector<16x128xf32>,
    return
  }
  func.func @transform_0(%arg0: i32) -> (i32, i32) {
    %c0_i32 = arith.constant 0 : i32
    %c0_i32_0 = arith.constant 0 : i32
    return %arg0, %c0_i32 : i32, i32
  }
  func.func @transform_1(%arg0: i32) -> (i32, i32) {
    %c0_i32 = arith.constant 0 : i32
    %c0_i32_0 = arith.constant 0 : i32
    %c0_i32_1 = arith.constant 0 : i32
    return %c0_i32, %c0_i32_0 : i32, i32
  }
  func.func @transform_2(%arg0: i32) -> (i32, i32) {
    %c0_i32 = arith.constant 0 : i32
    %c0_i32_0 = arith.constant 0 : i32
    %c0_i32_1 = arith.constant 0 : i32
    return %c0_i32, %c0_i32_0 : i32, i32
  }
  func.func @transform_3(%arg0: i32) -> (i32, i32) {
    %c0_i32 = arith.constant 0 : i32
    %c0_i32_0 = arith.constant 0 : i32
    %c0_i32_1 = arith.constant 0 : i32
    return %c0_i32, %c0_i32_0 : i32, i32
  }
  func.func @transform_4(%arg0: i32) -> (i32, i32) {
    %c0_i32 = arith.constant 0 : i32
    %c0_i32_0 = arith.constant 0 : i32
    %c0_i32_1 = arith.constant 0 : i32
    return %c0_i32, %c0_i32_0 : i32, i32
  }
  func.func @transform_5(%arg0: i32) -> (i32, i32) {
    %c0_i32 = arith.constant 0 : i32
    %c0_i32_0 = arith.constant 0 : i32
    %c0_i32_1 = arith.constant 0 : i32
    return %c0_i32, %c0_i32_0 : i32, i32
  }
  func.func @transform_6(%arg0: i32) -> (i32, i32) {
    %c0_i32 = arith.constant 0 : i32
    %c0_i32_0 = arith.constant 0 : i32
    %c0_i32_1 = arith.constant 0 : i32
    return %c0_i32, %c0_i32_0 : i32, i32
  }
  func.func @transform_7(%arg0: i32) -> (i32, i32) {
    %c0_i32 = arith.constant 0 : i32
    %c0_i32_0 = arith.constant 0 : i32
    return %arg0, %c0_i32 : i32, i32
  }
}

</mosaic_0001>

<llo_original>
// kernel: tpu_custom_call.1
$region0: #{tpu_custom_call.1}
  #allocation0 [shape = 'u32[]', space=smem, size = 0x4, offset = 0x4, fixed_abs, tag = 'smem constant byte address 0x4 - core index']
  #allocation1 [shape = 'u32[144,128]{1,0:T(1,128)}', space=vmem, size = 0x12000, scoped, tag = 'internal scratch']
  %s0 = inlined_call_operand.hbm [shape: f32[16,256], index: 0, kind: input, shape index: {}]
  %s1 = inlined_call_operand.hbm [shape: bf16[256,1024], index: 1, kind: input, shape index: {}]
  %s2 = inlined_call_operand.hbm [shape: f32[1,1024], index: 2, kind: input, shape index: {}]
  %s3 = inlined_call_operand.hbm [shape: bf16[1024,256], index: 3, kind: input, shape index: {}]
  %s4 = inlined_call_operand.vmem [shape: f32[1,256], index: 4, kind: input, shape index: {}]
  %s5 = inlined_call_operand.hbm [shape: bf16[256,128], index: 5, kind: input, shape index: {}]
  %s6 = inlined_call_operand.vmem [shape: f32[1,128], index: 6, kind: input, shape index: {}]
  %s7 = inlined_call_operand.hbm [shape: f32[16,128], index: 7, kind: output, shape index: {}]
  %s8 = sld [smem:[#allocation0]]
  $region58: #{tpu_custom_call.1} parent=0
    _
  %s10 = ssub.s32 1, %s8
  %s11 = scalar_select 0, %s10, %s8
  $region1: #{tpu_custom_call.1} parent=0
    #allocation2 [shape = 'u8[16384]{0}', space=vmem, size = 0x4000, scoped, tag = 'input window, operand 0, single buffered']
    #allocation3 [shape = 's32[1]{0}', space=sflag, size = 0x4, scoped, tag = 'scoped memory for tpu_custom_call.1']
    #allocation4 [shape = 's32[1]{0}', space=sflag, size = 0x4, scoped, tag = 'scoped memory for tpu_custom_call.1']
    #allocation5 [shape = 'u8[524288]{0}', space=vmem, size = 0x80000, scoped, tag = 'input window, operand 1, single buffered']
    #allocation6 [shape = 's32[1]{0}', space=sflag, size = 0x4, scoped, tag = 'scoped memory for tpu_custom_call.1']
    #allocation7 [shape = 'u8[4096]{0}', space=vmem, size = 0x1000, scoped, tag = 'input window, operand 2, single buffered']
    #allocation8 [shape = 'u8[524288]{0}', space=vmem, size = 0x80000, scoped, tag = 'input window, operand 3, single buffered']
    #allocation9 [shape = 's32[1]{0}', space=sflag, size = 0x4, scoped, tag = 'scoped memory for tpu_custom_call.1']
    #allocation10 [shape = 'u8[65536]{0}', space=vmem, size = 0x10000, scoped, tag = 'input window, operand 5, single buffered']
    #allocation11 [shape = 'u8[8192]{0}', space=vmem, size = 0x2000, scoped, tag = 'output window, operand 0, single buffered']
    %12 = vsyncpa [#allocation3], 0
    %13 = vsyncpa [#allocation6], 0
    %14 = vsyncpa [#allocation9], 0
    %15 = vsyncpa [#allocation4], 0
    // Predicated region
    $region2: #{tpu_custom_call.1} parent=1 // pred_check
      _
    $region3: #{tpu_custom_call.1} parent=1 // pred_check_branch
      %17 = sbr.rel (0) target = $region5
    $region4: #{tpu_custom_call.1} parent=1 // pred_region
      %s19 = ssub.s32 512, 512
      %20 = vsyncadd [#allocation3], %s19
      %s21 = sshll.u32 [#allocation2], 4
      %s22 = int_to_ptr.vmem [resolvable:$true] %s21
      %27 = dma.hbm_to_vmem [thread:$0]  %s0, 512, %s22, [#allocation3], 256, 256, 16
    $region5: #{tpu_custom_call.1} parent=1 // pred_fallthru
      _
    // Predicated region
    $region6: #{tpu_custom_call.1} parent=1 // pred_check
      _
    $region7: #{tpu_custom_call.1} parent=1 // pred_check_branch
      %29 = sbr.rel (0) target = $region9
    $region8: #{tpu_custom_call.1} parent=1 // pred_region
      %s31 = ssub.s32 16384, 16384
      %32 = vsyncadd [#allocation6], %s31
      %s33 = sshll.u32 [#allocation5], 4
      %s34 = int_to_ptr.vmem [resolvable:$true] %s33
      %39 = dma.hbm_to_vmem [thread:$0]  %s1, 16384, %s34, [#allocation6], 512, 512, 32
    $region9: #{tpu_custom_call.1} parent=1 // pred_fallthru
      _
    // Predicated region
    $region10: #{tpu_custom_call.1} parent=1 // pred_check
      _
    $region11: #{tpu_custom_call.1} parent=1 // pred_check_branch
      %41 = sbr.rel (0) target = $region13
    $region12: #{tpu_custom_call.1} parent=1 // pred_region
      %s43 = ssub.s32 128, 128
      %44 = vsyncadd [#allocation6], %s43
      %s46 = sshll.u32 [#allocation7], 4
      %s47 = int_to_ptr.vmem [resolvable:$true] %s46
      %49 = dma.hbm_to_vmem [thread:$0]  %s2, 128, %s47, [#allocation6]
    $region13: #{tpu_custom_call.1} parent=1 // pred_fallthru
      _
    // Predicated region
    $region14: #{tpu_custom_call.1} parent=1 // pred_check
      _
    $region15: #{tpu_custom_call.1} parent=1 // pred_check_branch
      %51 = sbr.rel (0) target = $region17
    $region16: #{tpu_custom_call.1} parent=1 // pred_region
      %s53 = ssub.s32 16384, 16384
      %54 = vsyncadd [#allocation9], %s53
      %s55 = sshll.u32 [#allocation8], 4
      %s56 = int_to_ptr.vmem [resolvable:$true] %s55
      %61 = dma.hbm_to_vmem [thread:$0]  %s3, 16384, %s56, [#allocation9], 128, 128, 8
    $region17: #{tpu_custom_call.1} parent=1 // pred_fallthru
      _
    // Predicated region
    $region18: #{tpu_custom_call.1} parent=1 // pred_check
      _
    $region19: #{tpu_custom_call.1} parent=1 // pred_check_branch
      %63 = sbr.rel (0) target = $region21
    $region20: #{tpu_custom_call.1} parent=1 // pred_region
      _
    $region21: #{tpu_custom_call.1} parent=1 // pred_fallthru
      _
    // Predicated region
    $region22: #{tpu_custom_call.1} parent=1 // pred_check
      _
    $region23: #{tpu_custom_call.1} parent=1 // pred_check_branch
      %65 = sbr.rel (0) target = $region25
    $region24: #{tpu_custom_call.1} parent=1 // pred_region
      %s67 = ssub.s32 2048, 2048
      %68 = vsyncadd [#allocation9], %s67
      %s69 = sshll.u32 [#allocation10], 4
      %s70 = int_to_ptr.vmem [resolvable:$true] %s69
      %75 = dma.hbm_to_vmem [thread:$0]  %s5, 2048, %s70, [#allocation9], 64, 64, 4
    $region25: #{tpu_custom_call.1} parent=1 // pred_fallthru
      _
    // Predicated region
    $region26: #{tpu_custom_call.1} parent=1 // pred_check
      _
    $region27: #{tpu_custom_call.1} parent=1 // pred_check_branch
      %77 = sbr.rel (0) target = $region29
    $region28: #{tpu_custom_call.1} parent=1 // pred_region
      _
    $region29: #{tpu_custom_call.1} parent=1 // pred_fallthru
      _
    // Predicated region
    $region30: #{tpu_custom_call.1} parent=1 // pred_check
      _
    $region31: #{tpu_custom_call.1} parent=1 // pred_check_branch
      %79 = sbr.rel (0) target = $region33
    $region32: #{tpu_custom_call.1} parent=1 // pred_region
      %80 = dma.done [#allocation3], 512
    $region33: #{tpu_custom_call.1} parent=1 // pred_fallthru
      _
    // Predicated region
    $region34: #{tpu_custom_call.1} parent=1 // pred_check
      _
    $region35: #{tpu_custom_call.1} parent=1 // pred_check_branch
      %82 = sbr.rel (0) target = $region37
    $region36: #{tpu_custom_call.1} parent=1 // pred_region
      %83 = dma.done [#allocation6], 16384
    $region37: #{tpu_custom_call.1} parent=1 // pred_fallthru
      _
    // Predicated region
    $region38: #{tpu_custom_call.1} parent=1 // pred_check
      _
    $region39: #{tpu_custom_call.1} parent=1 // pred_check_branch
      %85 = sbr.rel (0) target = $region41
    $region40: #{tpu_custom_call.1} parent=1 // pred_region
      %86 = dma.done [#allocation6], 128
    $region41: #{tpu_custom_call.1} parent=1 // pred_fallthru
      _
    // Predicated region
    $region42: #{tpu_custom_call.1} parent=1 // pred_check
      _
    $region43: #{tpu_custom_call.1} parent=1 // pred_check_branch
      %88 = sbr.rel (0) target = $region45
    $region44: #{tpu_custom_call.1} parent=1 // pred_region
      %89 = dma.done [#allocation9], 16384
    $region45: #{tpu_custom_call.1} parent=1 // pred_fallthru
      _
    // Predicated region
    $region46: #{tpu_custom_call.1} parent=1 // pred_check
      _
    $region47: #{tpu_custom_call.1} parent=1 // pred_check_branch
      %91 = sbr.rel (0) target = $region49
    $region48: #{tpu_custom_call.1} parent=1 // pred_region
      %92 = dma.done [#allocation9], 2048
    $region49: #{tpu_custom_call.1} parent=1 // pred_fallthru
      _
    %v94 = vld [vmem:[#allocation2] sm:$0xff]
    %v95 = vld [vmem:[#allocation2 + $0x8] sm:$0xff]
    %v96 = vld [vmem:[#allocation2 + $0x10] sm:$0xff]
    %v97 = vld [vmem:[#allocation2 + $0x18] sm:$0xff]
    %v98 = vpack.c.bf16 %v96, %v94
    %v99 = vpack.c.bf16 %v97, %v95
    %v100 = vld [vmem:[#allocation5] sm:$0xff]
    %v101 = vld [vmem:[#allocation5 + $0x8] sm:$0xff]
    %v102 = vld [vmem:[#allocation5 + $0x10] sm:$0xff]
    %v103 = vld [vmem:[#allocation5 + $0x18] sm:$0xff]
    %v104 = vld [vmem:[#allocation5 + $0x20] sm:$0xff]
    %v105 = vld [vmem:[#allocation5 + $0x28] sm:$0xff]
    %v106 = vld [vmem:[#allocation5 + $0x30] sm:$0xff]
    %v107 = vld [vmem:[#allocation5 + $0x38] sm:$0xff]
    %v108 = vld [vmem:[#allocation5 + $0x40] sm:$0xff]
    %v109 = vld [vmem:[#allocation5 + $0x48] sm:$0xff]
    %v110 = vld [vmem:[#allocation5 + $0x50] sm:$0xff]
    %v111 = vld [vmem:[#allocation5 + $0x58] sm:$0xff]
    %v112 = vld [vmem:[#allocation5 + $0x60] sm:$0xff]
    %v113 = vld [vmem:[#allocation5 + $0x68] sm:$0xff]
    %v114 = vld [vmem:[#allocation5 + $0x70] sm:$0xff]
    %v115 = vld [vmem:[#allocation5 + $0x78] sm:$0xff]
    %v116 = vld [vmem:[#allocation5 + $0x80] sm:$0xff]
    %v117 = vld [vmem:[#allocation5 + $0x88] sm:$0xff]
    %v118 = vld [vmem:[#allocation5 + $0x90] sm:$0xff]
    %v119 = vld [vmem:[#allocation5 + $0x98] sm:$0xff]
    %v120 = vld [vmem:[#allocation5 + $0xa0] sm:$0xff]
    %v121 = vld [vmem:[#allocation5 + $0xa8] sm:$0xff]
    %v122 = vld [vmem:[#allocation5 + $0xb0] sm:$0xff]
    %v123 = vld [vmem:[#allocation5 + $0xb8] sm:$0xff]
    %v124 = vld [vmem:[#allocation5 + $0xc0] sm:$0xff]
    %v125 = vld [vmem:[#allocation5 + $0xc8] sm:$0xff]
    %v126 = vld [vmem:[#allocation5 + $0xd0] sm:$0xff]
    %v127 = vld [vmem:[#allocation5 + $0xd8] sm:$0xff]
    %v128 = vld [vmem:[#allocation5 + $0xe0] sm:$0xff]
    %v129 = vld [vmem:[#allocation5 + $0xe8] sm:$0xff]
    %v130 = vld [vmem:[#allocation5 + $0xf0] sm:$0xff]
    %v131 = vld [vmem:[#allocation5 + $0xf8] sm:$0xff]
    %v132 = vld [vmem:[#allocation5 + $0x100] sm:$0xff]
    %v133 = vld [vmem:[#allocation5 + $0x108] sm:$0xff]
    %v134 = vld [vmem:[#allocation5 + $0x110] sm:$0xff]
    %v135 = vld [vmem:[#allocation5 + $0x118] sm:$0xff]
    %v136 = vld [vmem:[#allocation5 + $0x120] sm:$0xff]
    %v137 = vld [vmem:[#allocation5 + $0x128] sm:$0xff]
    %v138 = vld [vmem:[#allocation5 + $0x130] sm:$0xff]
    %v139 = vld [vmem:[#allocation5 + $0x138] sm:$0xff]
    %v140 = vld [vmem:[#allocation5 + $0x140] sm:$0xff]
    %v141 = vld [vmem:[#allocation5 + $0x148] sm:$0xff]
    %v142 = vld [vmem:[#allocation5 + $0x150] sm:$0xff]
    %v143 = vld [vmem:[#allocation5 + $0x158] sm:$0xff]
    %v144 = vld [vmem:[#allocation5 + $0x160] sm:$0xff]
    %v145 = vld [vmem:[#allocation5 + $0x168] sm:$0xff]
    %v146 = vld [vmem:[#allocation5 + $0x170] sm:$0xff]
    %v147 = vld [vmem:[#allocation5 + $0x178] sm:$0xff]
    %v148 = vld [vmem:[#allocation5 + $0x180] sm:$0xff]
    %v149 = vld [vmem:[#allocation5 + $0x188] sm:$0xff]
    %v150 = vld [vmem:[#allocation5 + $0x190] sm:$0xff]
    %v151 = vld [vmem:[#allocation5 + $0x198] sm:$0xff]
    %v152 = vld [vmem:[#allocation5 + $0x1a0] sm:$0xff]
    %v153 = vld [vmem:[#allocation5 + $0x1a8] sm:$0xff]
    %v154 = vld [vmem:[#allocation5 + $0x1b0] sm:$0xff]
    %v155 = vld [vmem:[#allocation5 + $0x1b8] sm:$0xff]
    %v156 = vld [vmem:[#allocation5 + $0x1c0] sm:$0xff]
    %v157 = vld [vmem:[#allocation5 + $0x1c8] sm:$0xff]
    %v158 = vld [vmem:[#allocation5 + $0x1d0] sm:$0xff]
    %v159 = vld [vmem:[#allocation5 + $0x1d8] sm:$0xff]
    %v160 = vld [vmem:[#allocation5 + $0x1e0] sm:$0xff]
    %v161 = vld [vmem:[#allocation5 + $0x1e8] sm:$0xff]
    %v162 = vld [vmem:[#allocation5 + $0x1f0] sm:$0xff]
    %v163 = vld [vmem:[#allocation5 + $0x1f8] sm:$0xff]
    %v164 = vld [vmem:[#allocation5 + $0x200] sm:$0xff]
    %v165 = vld [vmem:[#allocation5 + $0x208] sm:$0xff]
    %v166 = vld [vmem:[#allocation5 + $0x210] sm:$0xff]
    %v167 = vld [vmem:[#allocation5 + $0x218] sm:$0xff]
    %v168 = vld [vmem:[#allocation5 + $0x220] sm:$0xff]
    %v169 = vld [vmem:[#allocation5 + $0x228] sm:$0xff]
    %v170 = vld [vmem:[#allocation5 + $0x230] sm:$0xff]
    %v171 = vld [vmem:[#allocation5 + $0x238] sm:$0xff]
    %v172 = vld [vmem:[#allocation5 + $0x240] sm:$0xff]
    %v173 = vld [vmem:[#allocation5 + $0x248] sm:$0xff]
    %v174 = vld [vmem:[#allocation5 + $0x250] sm:$0xff]
    %v175 = vld [vmem:[#allocation5 + $0x258] sm:$0xff]
    %v176 = vld [vmem:[#allocation5 + $0x260] sm:$0xff]
    %v177 = vld [vmem:[#allocation5 + $0x268] sm:$0xff]
    %v178 = vld [vmem:[#allocation5 + $0x270] sm:$0xff]
    %v179 = vld [vmem:[#allocation5 + $0x278] sm:$0xff]
    %v180 = vld [vmem:[#allocation5 + $0x280] sm:$0xff]
    %v181 = vld [vmem:[#allocation5 + $0x288] sm:$0xff]
    %v182 = vld [vmem:[#allocation5 + $0x290] sm:$0xff]
    %v183 = vld [vmem:[#allocation5 + $0x298] sm:$0xff]
    %v184 = vld [vmem:[#allocation5 + $0x2a0] sm:$0xff]
    %v185 = vld [vmem:[#allocation5 + $0x2a8] sm:$0xff]
    %v186 = vld [vmem:[#allocation5 + $0x2b0] sm:$0xff]
    %v187 = vld [vmem:[#allocation5 + $0x2b8] sm:$0xff]
    %v188 = vld [vmem:[#allocation5 + $0x2c0] sm:$0xff]
    %v189 = vld [vmem:[#allocation5 + $0x2c8] sm:$0xff]
    %v190 = vld [vmem:[#allocation5 + $0x2d0] sm:$0xff]
    %v191 = vld [vmem:[#allocation5 + $0x2d8] sm:$0xff]
    %v192 = vld [vmem:[#allocation5 + $0x2e0] sm:$0xff]
    %v193 = vld [vmem:[#allocation5 + $0x2e8] sm:$0xff]
    %v194 = vld [vmem:[#allocation5 + $0x2f0] sm:$0xff]
    %v195 = vld [vmem:[#allocation5 + $0x2f8] sm:$0xff]
    %v196 = vld [vmem:[#allocation5 + $0x300] sm:$0xff]
    %v197 = vld [vmem:[#allocation5 + $0x308] sm:$0xff]
    %v198 = vld [vmem:[#allocation5 + $0x310] sm:$0xff]
    %v199 = vld [vmem:[#allocation5 + $0x318] sm:$0xff]
    %v200 = vld [vmem:[#allocation5 + $0x320] sm:$0xff]
    %v201 = vld [vmem:[#allocation5 + $0x328] sm:$0xff]
    %v202 = vld [vmem:[#allocation5 + $0x330] sm:$0xff]
    %v203 = vld [vmem:[#allocation5 + $0x338] sm:$0xff]
    %v204 = vld [vmem:[#allocation5 + $0x340] sm:$0xff]
    %v205 = vld [vmem:[#allocation5 + $0x348] sm:$0xff]
    %v206 = vld [vmem:[#allocation5 + $0x350] sm:$0xff]
    %v207 = vld [vmem:[#allocation5 + $0x358] sm:$0xff]
    %v208 = vld [vmem:[#allocation5 + $0x360] sm:$0xff]
    %v209 = vld [vmem:[#allocation5 + $0x368] sm:$0xff]
    %v210 = vld [vmem:[#allocation5 + $0x370] sm:$0xff]
    %v211 = vld [vmem:[#allocation5 + $0x378] sm:$0xff]
    %v212 = vld [vmem:[#allocation5 + $0x380] sm:$0xff]
    %v213 = vld [vmem:[#allocation5 + $0x388] sm:$0xff]
    %v214 = vld [vmem:[#allocation5 + $0x390] sm:$0xff]
    %v215 = vld [vmem:[#allocation5 + $0x398] sm:$0xff]
    %v216 = vld [vmem:[#allocation5 + $0x3a0] sm:$0xff]
    %v217 = vld [vmem:[#allocation5 + $0x3a8] sm:$0xff]
    %v218 = vld [vmem:[#allocation5 + $0x3b0] sm:$0xff]
    %v219 = vld [vmem:[#allocation5 + $0x3b8] sm:$0xff]
    %v220 = vld [vmem:[#allocation5 + $0x3c0] sm:$0xff]
    %v221 = vld [vmem:[#allocation5 + $0x3c8] sm:$0xff]
    %v222 = vld [vmem:[#allocation5 + $0x3d0] sm:$0xff]
    %v223 = vld [vmem:[#allocation5 + $0x3d8] sm:$0xff]
    %v224 = vld [vmem:[#allocation5 + $0x3e0] sm:$0xff]
    %v225 = vld [vmem:[#allocation5 + $0x3e8] sm:$0xff]
    %v226 = vld [vmem:[#allocation5 + $0x3f0] sm:$0xff]
    %v227 = vld [vmem:[#allocation5 + $0x3f8] sm:$0xff]
    %v228 = vld [vmem:[#allocation7] sm:$0xff]
    %v230 = vlaneseq
    %v231 = vshrl.u32 %v230, 7
    %v232 = vsub.s32 0, %v231
    %v233 = vrot.slane %v228, %v232
    %v234 = vlaneseq
    %v235 = vshrl.u32 %v234, 7
    %v236 = vsub.s32 1, %v235
    %v237 = vrot.slane %v228, %v236
    %v238 = vlaneseq
    %v239 = vshrl.u32 %v238, 7
    %v240 = vsub.s32 2, %v239
    %v241 = vrot.slane %v228, %v240
    %v242 = vlaneseq
    %v243 = vshrl.u32 %v242, 7
    %v244 = vsub.s32 3, %v243
    %v245 = vrot.slane %v228, %v244
    %v246 = vlaneseq
    %v247 = vshrl.u32 %v246, 7
    %v248 = vsub.s32 4, %v247
    %v249 = vrot.slane %v228, %v248
    %v250 = vlaneseq
    %v251 = vshrl.u32 %v250, 7
    %v252 = vsub.s32 5, %v251
    %v253 = vrot.slane %v228, %v252
    %v254 = vlaneseq
    %v255 = vshrl.u32 %v254, 7
    %v256 = vsub.s32 6, %v255
    %v257 = vrot.slane %v228, %v256
    %v258 = vlaneseq
    %v259 = vshrl.u32 %v258, 7
    %v260 = vsub.s32 7, %v259
    %v261 = vrot.slane %v228, %v260
    %v398 = vunpack.c.l.b16 %v100
    %v399 = vunpack.c.h.b16 %v100
    %v400 = vunpack.c.l.b16 %v101
    %v401 = vunpack.c.h.b16 %v101
    %v402 = vunpack.c.l.b16 %v102
    %v403 = vunpack.c.h.b16 %v102
    %v404 = vunpack.c.l.b16 %v103
    %v405 = vunpack.c.h.b16 %v103
    %v406 = vunpack.c.l.b16 %v104
    %v407 = vunpack.c.h.b16 %v104
    %v408 = vunpack.c.l.b16 %v105
    %v409 = vunpack.c.h.b16 %v105
    %v410 = vunpack.c.l.b16 %v106
    %v411 = vunpack.c.h.b16 %v106
    %v412 = vunpack.c.l.b16 %v107
    %v413 = vunpack.c.h.b16 %v107
    %v414 = vunpack.c.l.b16 %v108
    %v415 = vunpack.c.h.b16 %v108
    %v416 = vunpack.c.l.b16 %v109
    %v417 = vunpack.c.h.b16 %v109
    %v418 = vunpack.c.l.b16 %v110
    %v419 = vunpack.c.h.b16 %v110
    %v420 = vunpack.c.l.b16 %v111
    %v421 = vunpack.c.h.b16 %v111
    %v422 = vunpack.c.l.b16 %v112
    %v423 = vunpack.c.h.b16 %v112
    %v424 = vunpack.c.l.b16 %v113
    %v425 = vunpack.c.h.b16 %v113
    %v426 = vunpack.c.l.b16 %v114
    %v427 = vunpack.c.h.b16 %v114
    %v428 = vunpack.c.l.b16 %v115
    %v429 = vunpack.c.h.b16 %v115
    %v430 = vunpack.c.l.b16 %v116
    %v431 = vunpack.c.h.b16 %v116
    %v432 = vunpack.c.l.b16 %v117
    %v433 = vunpack.c.h.b16 %v117
    %v434 = vunpack.c.l.b16 %v118
    %v435 = vunpack.c.h.b16 %v118
    %v436 = vunpack.c.l.b16 %v119
    %v437 = vunpack.c.h.b16 %v119
    %v438 = vunpack.c.l.b16 %v120
    %v439 = vunpack.c.h.b16 %v120
    %v440 = vunpack.c.l.b16 %v121
    %v441 = vunpack.c.h.b16 %v121
    %v442 = vunpack.c.l.b16 %v122
    %v443 = vunpack.c.h.b16 %v122
    %v444 = vunpack.c.l.b16 %v123
    %v445 = vunpack.c.h.b16 %v123
    %v446 = vunpack.c.l.b16 %v124
    %v447 = vunpack.c.h.b16 %v124
    %v448 = vunpack.c.l.b16 %v125
    %v449 = vunpack.c.h.b16 %v125
    %v450 = vunpack.c.l.b16 %v126
    %v451 = vunpack.c.h.b16 %v126
    %v452 = vunpack.c.l.b16 %v127
    %v453 = vunpack.c.h.b16 %v127
    %v454 = vunpack.c.l.b16 %v128
    %v455 = vunpack.c.h.b16 %v128
    %v456 = vunpack.c.l.b16 %v129
    %v457 = vunpack.c.h.b16 %v129
    %v458 = vunpack.c.l.b16 %v130
    %v459 = vunpack.c.h.b16 %v130
    %v460 = vunpack.c.l.b16 %v131
    %v461 = vunpack.c.h.b16 %v131
    %v462 = vunpack.c.l.b16 %v132
    %v463 = vunpack.c.h.b16 %v132
    %v464 = vunpack.c.l.b16 %v133
    %v465 = vunpack.c.h.b16 %v133
    %v466 = vunpack.c.l.b16 %v134
    %v467 = vunpack.c.h.b16 %v134
    %v468 = vunpack.c.l.b16 %v135
    %v469 = vunpack.c.h.b16 %v135
    %v470 = vunpack.c.l.b16 %v136
    %v471 = vunpack.c.h.b16 %v136
    %v472 = vunpack.c.l.b16 %v137
    %v473 = vunpack.c.h.b16 %v137
    %v474 = vunpack.c.l.b16 %v138
    %v475 = vunpack.c.h.b16 %v138
    %v476 = vunpack.c.l.b16 %v139
    %v477 = vunpack.c.h.b16 %v139
    %v478 = vunpack.c.l.b16 %v140
    %v479 = vunpack.c.h.b16 %v140
    %v480 = vunpack.c.l.b16 %v141
    %v481 = vunpack.c.h.b16 %v141
    %v482 = vunpack.c.l.b16 %v142
    %v483 = vunpack.c.h.b16 %v142
    %v484 = vunpack.c.l.b16 %v143
    %v485 = vunpack.c.h.b16 %v143
    %v486 = vunpack.c.l.b16 %v144
    %v487 = vunpack.c.h.b16 %v144
    %v488 = vunpack.c.l.b16 %v145
    %v489 = vunpack.c.h.b16 %v145
    %v490 = vunpack.c.l.b16 %v146
    %v491 = vunpack.c.h.b16 %v146
    %v492 = vunpack.c.l.b16 %v147
    %v493 = vunpack.c.h.b16 %v147
    %v494 = vunpack.c.l.b16 %v148
    %v495 = vunpack.c.h.b16 %v148
    %v496 = vunpack.c.l.b16 %v149
    %v497 = vunpack.c.h.b16 %v149
    %v498 = vunpack.c.l.b16 %v150
    %v499 = vunpack.c.h.b16 %v150
    %v500 = vunpack.c.l.b16 %v151
    %v501 = vunpack.c.h.b16 %v151
    %v502 = vunpack.c.l.b16 %v152
    %v503 = vunpack.c.h.b16 %v152
    %v504 = vunpack.c.l.b16 %v153
    %v505 = vunpack.c.h.b16 %v153
    %v506 = vunpack.c.l.b16 %v154
    %v507 = vunpack.c.h.b16 %v154
    %v508 = vunpack.c.l.b16 %v155
    %v509 = vunpack.c.h.b16 %v155
    %v510 = vunpack.c.l.b16 %v156
    %v511 = vunpack.c.h.b16 %v156
    %v512 = vunpack.c.l.b16 %v157
    %v513 = vunpack.c.h.b16 %v157
    %v514 = vunpack.c.l.b16 %v158
    %v515 = vunpack.c.h.b16 %v158
    %v516 = vunpack.c.l.b16 %v159
    %v517 = vunpack.c.h.b16 %v159
    %v518 = vunpack.c.l.b16 %v160
    %v519 = vunpack.c.h.b16 %v160
    %v520 = vunpack.c.l.b16 %v161
    %v521 = vunpack.c.h.b16 %v161
    %v522 = vunpack.c.l.b16 %v162
    %v523 = vunpack.c.h.b16 %v162
    %v524 = vunpack.c.l.b16 %v163
    %v525 = vunpack.c.h.b16 %v163
    %v526 = vunpack.c.l.b16 %v164
    %v527 = vunpack.c.h.b16 %v164
    %v528 = vunpack.c.l.b16 %v165
    %v529 = vunpack.c.h.b16 %v165
    %v530 = vunpack.c.l.b16 %v166
    %v531 = vunpack.c.h.b16 %v166
    %v532 = vunpack.c.l.b16 %v167
    %v533 = vunpack.c.h.b16 %v167
    %v534 = vunpack.c.l.b16 %v168
    %v535 = vunpack.c.h.b16 %v168
    %v536 = vunpack.c.l.b16 %v169
    %v537 = vunpack.c.h.b16 %v169
    %v538 = vunpack.c.l.b16 %v170
    %v539 = vunpack.c.h.b16 %v170
    %v540 = vunpack.c.l.b16 %v171
    %v541 = vunpack.c.h.b16 %v171
    %v542 = vunpack.c.l.b16 %v172
    %v543 = vunpack.c.h.b16 %v172
    %v544 = vunpack.c.l.b16 %v173
    %v545 = vunpack.c.h.b16 %v173
    %v546 = vunpack.c.l.b16 %v174
    %v547 = vunpack.c.h.b16 %v174
    %v548 = vunpack.c.l.b16 %v175
    %v549 = vunpack.c.h.b16 %v175
    %v550 = vunpack.c.l.b16 %v176
    %v551 = vunpack.c.h.b16 %v176
    %v552 = vunpack.c.l.b16 %v177
    %v553 = vunpack.c.h.b16 %v177
    %v554 = vunpack.c.l.b16 %v178
    %v555 = vunpack.c.h.b16 %v178
    %v556 = vunpack.c.l.b16 %v179
    %v557 = vunpack.c.h.b16 %v179
    %v558 = vunpack.c.l.b16 %v180
    %v559 = vunpack.c.h.b16 %v180
    %v560 = vunpack.c.l.b16 %v181
    %v561 = vunpack.c.h.b16 %v181
    %v562 = vunpack.c.l.b16 %v182
    %v563 = vunpack.c.h.b16 %v182
    %v564 = vunpack.c.l.b16 %v183
    %v565 = vunpack.c.h.b16 %v183
    %v566 = vunpack.c.l.b16 %v184
    %v567 = vunpack.c.h.b16 %v184
    %v568 = vunpack.c.l.b16 %v185
    %v569 = vunpack.c.h.b16 %v185
    %v570 = vunpack.c.l.b16 %v186
    %v571 = vunpack.c.h.b16 %v186
    %v572 = vunpack.c.l.b16 %v187
    %v573 = vunpack.c.h.b16 %v187
    %v574 = vunpack.c.l.b16 %v188
    %v575 = vunpack.c.h.b16 %v188
    %v576 = vunpack.c.l.b16 %v189
    %v577 = vunpack.c.h.b16 %v189
    %v578 = vunpack.c.l.b16 %v190
    %v579 = vunpack.c.h.b16 %v190
    %v580 = vunpack.c.l.b16 %v191
    %v581 = vunpack.c.h.b16 %v191
    %v582 = vunpack.c.l.b16 %v192
    %v583 = vunpack.c.h.b16 %v192
    %v584 = vunpack.c.l.b16 %v193
    %v585 = vunpack.c.h.b16 %v193
    %v586 = vunpack.c.l.b16 %v194
    %v587 = vunpack.c.h.b16 %v194
    %v588 = vunpack.c.l.b16 %v195
    %v589 = vunpack.c.h.b16 %v195
    %v590 = vunpack.c.l.b16 %v196
    %v591 = vunpack.c.h.b16 %v196
    %v592 = vunpack.c.l.b16 %v197
    %v593 = vunpack.c.h.b16 %v197
    %v594 = vunpack.c.l.b16 %v198
    %v595 = vunpack.c.h.b16 %v198
    %v596 = vunpack.c.l.b16 %v199
    %v597 = vunpack.c.h.b16 %v199
    %v598 = vunpack.c.l.b16 %v200
    %v599 = vunpack.c.h.b16 %v200
    %v600 = vunpack.c.l.b16 %v201
    %v601 = vunpack.c.h.b16 %v201
    %v602 = vunpack.c.l.b16 %v202
    %v603 = vunpack.c.h.b16 %v202
    %v604 = vunpack.c.l.b16 %v203
    %v605 = vunpack.c.h.b16 %v203
    %v606 = vunpack.c.l.b16 %v204
    %v607 = vunpack.c.h.b16 %v204
    %v608 = vunpack.c.l.b16 %v205
    %v609 = vunpack.c.h.b16 %v205
    %v610 = vunpack.c.l.b16 %v206
    %v611 = vunpack.c.h.b16 %v206
    %v612 = vunpack.c.l.b16 %v207
    %v613 = vunpack.c.h.b16 %v207
    %v614 = vunpack.c.l.b16 %v208
    %v615 = vunpack.c.h.b16 %v208
    %v616 = vunpack.c.l.b16 %v209
    %v617 = vunpack.c.h.b16 %v209
    %v618 = vunpack.c.l.b16 %v210
    %v619 = vunpack.c.h.b16 %v210
    %v620 = vunpack.c.l.b16 %v211
    %v621 = vunpack.c.h.b16 %v211
    %v622 = vunpack.c.l.b16 %v212
    %v623 = vunpack.c.h.b16 %v212
    %v624 = vunpack.c.l.b16 %v213
    %v625 = vunpack.c.h.b16 %v213
    %v626 = vunpack.c.l.b16 %v214
    %v627 = vunpack.c.h.b16 %v214
    %v628 = vunpack.c.l.b16 %v215
    %v629 = vunpack.c.h.b16 %v215
    %v630 = vunpack.c.l.b16 %v216
    %v631 = vunpack.c.h.b16 %v216
    %v632 = vunpack.c.l.b16 %v217
    %v633 = vunpack.c.h.b16 %v217
    %v634 = vunpack.c.l.b16 %v218
    %v635 = vunpack.c.h.b16 %v218
    %v636 = vunpack.c.l.b16 %v219
    %v637 = vunpack.c.h.b16 %v219
    %v638 = vunpack.c.l.b16 %v220
    %v639 = vunpack.c.h.b16 %v220
    %v640 = vunpack.c.l.b16 %v221
    %v641 = vunpack.c.h.b16 %v221
    %v642 = vunpack.c.l.b16 %v222
    %v643 = vunpack.c.h.b16 %v222
    %v644 = vunpack.c.l.b16 %v223
    %v645 = vunpack.c.h.b16 %v223
    %v646 = vunpack.c.l.b16 %v224
    %v647 = vunpack.c.h.b16 %v224
    %v648 = vunpack.c.l.b16 %v225
    %v649 = vunpack.c.h.b16 %v225
    %v650 = vunpack.c.l.b16 %v226
    %v651 = vunpack.c.h.b16 %v226
    %v652 = vunpack.c.l.b16 %v227
    %v653 = vunpack.c.h.b16 %v227
    %v654 = vpack.c.b16 %v406, %v398
    %v655 = vpack.c.b16 %v407, %v399
    %v656 = vpack.c.b16 %v408, %v400
    %v657 = vpack.c.b16 %v409, %v401
    %v658 = vpack.c.b16 %v410, %v402
    %v659 = vpack.c.b16 %v411, %v403
    %v660 = vpack.c.b16 %v412, %v404
    %v661 = vpack.c.b16 %v413, %v405
    %v662 = vpack.c.b16 %v422, %v414
    %v663 = vpack.c.b16 %v423, %v415
    %v664 = vpack.c.b16 %v424, %v416
    %v665 = vpack.c.b16 %v425, %v417
    %v666 = vpack.c.b16 %v426, %v418
    %v667 = vpack.c.b16 %v427, %v419
    %v668 = vpack.c.b16 %v428, %v420
    %v669 = vpack.c.b16 %v429, %v421
    %v670 = vpack.c.b16 %v438, %v430
    %v671 = vpack.c.b16 %v439, %v431
    %v672 = vpack.c.b16 %v440, %v432
    %v673 = vpack.c.b16 %v441, %v433
    %v674 = vpack.c.b16 %v442, %v434
    %v675 = vpack.c.b16 %v443, %v435
    %v676 = vpack.c.b16 %v444, %v436
    %v677 = vpack.c.b16 %v445, %v437
    %v678 = vpack.c.b16 %v454, %v446
    %v679 = vpack.c.b16 %v455, %v447
    %v680 = vpack.c.b16 %v456, %v448
    %v681 = vpack.c.b16 %v457, %v449
    %v682 = vpack.c.b16 %v458, %v450
    %v683 = vpack.c.b16 %v459, %v451
    %v684 = vpack.c.b16 %v460, %v452
    %v685 = vpack.c.b16 %v461, %v453
    %v686 = vpack.c.b16 %v470, %v462
    %v687 = vpack.c.b16 %v471, %v463
    %v688 = vpack.c.b16 %v472, %v464
    %v689 = vpack.c.b16 %v473, %v465
    %v690 = vpack.c.b16 %v474, %v466
    %v691 = vpack.c.b16 %v475, %v467
    %v692 = vpack.c.b16 %v476, %v468
    %v693 = vpack.c.b16 %v477, %v469
    %v694 = vpack.c.b16 %v486, %v478
    %v695 = vpack.c.b16 %v487, %v479
    %v696 = vpack.c.b16 %v488, %v480
    %v697 = vpack.c.b16 %v489, %v481
    %v698 = vpack.c.b16 %v490, %v482
    %v699 = vpack.c.b16 %v491, %v483
    %v700 = vpack.c.b16 %v492, %v484
    %v701 = vpack.c.b16 %v493, %v485
    %v702 = vpack.c.b16 %v502, %v494
    %v703 = vpack.c.b16 %v503, %v495
    %v704 = vpack.c.b16 %v504, %v496
    %v705 = vpack.c.b16 %v505, %v497
    %v706 = vpack.c.b16 %v506, %v498
    %v707 = vpack.c.b16 %v507, %v499
    %v708 = vpack.c.b16 %v508, %v500
    %v709 = vpack.c.b16 %v509, %v501
    %v710 = vpack.c.b16 %v518, %v510
    %v711 = vpack.c.b16 %v519, %v511
    %v712 = vpack.c.b16 %v520, %v512
    %v713 = vpack.c.b16 %v521, %v513
    %v714 = vpack.c.b16 %v522, %v514
    %v715 = vpack.c.b16 %v523, %v515
    %v716 = vpack.c.b16 %v524, %v516
    %v717 = vpack.c.b16 %v525, %v517
    %v718 = vpack.c.b16 %v534, %v526
    %v719 = vpack.c.b16 %v535, %v527
    %v720 = vpack.c.b16 %v536, %v528
    %v721 = vpack.c.b16 %v537, %v529
    %v722 = vpack.c.b16 %v538, %v530
    %v723 = vpack.c.b16 %v539, %v531
    %v724 = vpack.c.b16 %v540, %v532
    %v725 = vpack.c.b16 %v541, %v533
    %v726 = vpack.c.b16 %v550, %v542
    %v727 = vpack.c.b16 %v551, %v543
    %v728 = vpack.c.b16 %v552, %v544
    %v729 = vpack.c.b16 %v553, %v545
    %v730 = vpack.c.b16 %v554, %v546
    %v731 = vpack.c.b16 %v555, %v547
    %v732 = vpack.c.b16 %v556, %v548
    %v733 = vpack.c.b16 %v557, %v549
    %v734 = vpack.c.b16 %v566, %v558
    %v735 = vpack.c.b16 %v567, %v559
    %v736 = vpack.c.b16 %v568, %v560
    %v737 = vpack.c.b16 %v569, %v561
    %v738 = vpack.c.b16 %v570, %v562
    %v739 = vpack.c.b16 %v571, %v563
    %v740 = vpack.c.b16 %v572, %v564
    %v741 = vpack.c.b16 %v573, %v565
    %v742 = vpack.c.b16 %v582, %v574
    %v743 = vpack.c.b16 %v583, %v575
    %v744 = vpack.c.b16 %v584, %v576
    %v745 = vpack.c.b16 %v585, %v577
    %v746 = vpack.c.b16 %v586, %v578
    %v747 = vpack.c.b16 %v587, %v579
    %v748 = vpack.c.b16 %v588, %v580
    %v749 = vpack.c.b16 %v589, %v581
    %v750 = vpack.c.b16 %v598, %v590
    %v751 = vpack.c.b16 %v599, %v591
    %v752 = vpack.c.b16 %v600, %v592
    %v753 = vpack.c.b16 %v601, %v593
    %v754 = vpack.c.b16 %v602, %v594
    %v755 = vpack.c.b16 %v603, %v595
    %v756 = vpack.c.b16 %v604, %v596
    %v757 = vpack.c.b16 %v605, %v597
    %v758 = vpack.c.b16 %v614, %v606
    %v759 = vpack.c.b16 %v615, %v607
    %v760 = vpack.c.b16 %v616, %v608
    %v761 = vpack.c.b16 %v617, %v609
    %v762 = vpack.c.b16 %v618, %v610
    %v763 = vpack.c.b16 %v619, %v611
    %v764 = vpack.c.b16 %v620, %v612
    %v765 = vpack.c.b16 %v621, %v613
    %v766 = vpack.c.b16 %v630, %v622
    %v767 = vpack.c.b16 %v631, %v623
    %v768 = vpack.c.b16 %v632, %v624
    %v769 = vpack.c.b16 %v633, %v625
    %v770 = vpack.c.b16 %v634, %v626
    %v771 = vpack.c.b16 %v635, %v627
    %v772 = vpack.c.b16 %v636, %v628
    %v773 = vpack.c.b16 %v637, %v629
    %v774 = vpack.c.b16 %v646, %v638
    %v775 = vpack.c.b16 %v647, %v639
    %v776 = vpack.c.b16 %v648, %v640
    %v777 = vpack.c.b16 %v649, %v641
    %v778 = vpack.c.b16 %v650, %v642
    %v779 = vpack.c.b16 %v651, %v643
    %v780 = vpack.c.b16 %v652, %v644
    %v781 = vpack.c.b16 %v653, %v645
    %910 = vmatprep.subr.bf16.mxu0 %v655
    %911 = vmatpush1.bf16.msra.mxu0 %v654
    %912 = vmatprep.subr.bf16.mxu0 %v663
    %913 = vmatpush1.bf16.msra.mxu0 %v662
    %914 = vmatprep.subr.bf16.mxu0 %v671
    %915 = vmatpush1.bf16.msra.mxu0 %v670
    %916 = vmatprep.subr.bf16.mxu0 %v679
    %917 = vmatpush1.bf16.msra.mxu0 %v678
    %918 = vmatprep.subr.bf16.mxu0 %v687
    %919 = vmatpush1.bf16.msra.mxu0 %v686
    %920 = vmatprep.subr.bf16.mxu0 %v695
    %921 = vmatpush1.bf16.msra.mxu0 %v694
    %922 = vmatprep.subr.bf16.mxu0 %v703
    %923 = vmatpush1.bf16.msra.mxu0 %v702
    %924 = vmatprep.subr.bf16.mxu0 %v711
    %925 = vmatpush1.bf16.msra.mxu0 %v710
    %926 = vmatprep.subr.bf16.mxu0 %v719
    %927 = vmatpush1.bf16.msra.mxu0 %v718
    %928 = vmatprep.subr.bf16.mxu0 %v727
    %929 = vmatpush1.bf16.msra.mxu0 %v726
    %930 = vmatprep.subr.bf16.mxu0 %v735
    %931 = vmatpush1.bf16.msra.mxu0 %v734
    %932 = vmatprep.subr.bf16.mxu0 %v743
    %933 = vmatpush1.bf16.msra.mxu0 %v742
    %934 = vmatprep.subr.bf16.mxu0 %v751
    %935 = vmatpush1.bf16.msra.mxu0 %v750
    %936 = vmatprep.subr.bf16.mxu0 %v759
    %937 = vmatpush1.bf16.msra.mxu0 %v758
    %938 = vmatprep.subr.bf16.mxu0 %v767
    %939 = vmatpush1.bf16.msra.mxu0 %v766
    %940 = vmatprep.subr.bf16.mxu0 %v775
    %941 = vmatpush1.bf16.msra.mxu0 %v774
    %942 = vmatprep.mubr.bf16.mxu0 %v99
    %943 = vmatmul.mubr.bf16.gmra.mrb[0].mxu0 %v98
    %v944 = vpop.f32.mrb[0].mxu0
    %v945 = vadd.f32 %v233, %v944
    %v946 = vpop.f32.mrb[0].mxu0
    %v947 = vadd.f32 %v237, %v946
    %v948 = vpop.f32.mrb[0].mxu0
    %v949 = vadd.f32 %v233, %v948
    %v950 = vpop.f32.mrb[0].mxu0
    %v951 = vadd.f32 %v237, %v950
    %952 = vdwg.mxu0
    %953 = vmatprep.subr.bf16.mxu0 %v657
    %954 = vmatpush1.bf16.msra.mxu0 %v656
    %955 = vmatprep.subr.bf16.mxu0 %v665
    %956 = vmatpush1.bf16.msra.mxu0 %v664
    %957 = vmatprep.subr.bf16.mxu0 %v673
    %958 = vmatpush1.bf16.msra.mxu0 %v672
    %959 = vmatprep.subr.bf16.mxu0 %v681
    %960 = vmatpush1.bf16.msra.mxu0 %v680
    %961 = vmatprep.subr.bf16.mxu0 %v689
    %962 = vmatpush1.bf16.msra.mxu0 %v688
    %963 = vmatprep.subr.bf16.mxu0 %v697
    %964 = vmatpush1.bf16.msra.mxu0 %v696
    %965 = vmatprep.subr.bf16.mxu0 %v705
    %966 = vmatpush1.bf16.msra.mxu0 %v704
    %967 = vmatprep.subr.bf16.mxu0 %v713
    %968 = vmatpush1.bf16.msra.mxu0 %v712
    %969 = vmatprep.subr.bf16.mxu0 %v721
    %970 = vmatpush1.bf16.msra.mxu0 %v720
    %971 = vmatprep.subr.bf16.mxu0 %v729
    %972 = vmatpush1.bf16.msra.mxu0 %v728
    %973 = vmatprep.subr.bf16.mxu0 %v737
    %974 = vmatpush1.bf16.msra.mxu0 %v736
    %975 = vmatprep.subr.bf16.mxu0 %v745
    %976 = vmatpush1.bf16.msra.mxu0 %v744
    %977 = vmatprep.subr.bf16.mxu0 %v753
    %978 = vmatpush1.bf16.msra.mxu0 %v752
    %979 = vmatprep.subr.bf16.mxu0 %v761
    %980 = vmatpush1.bf16.msra.mxu0 %v760
    %981 = vmatprep.subr.bf16.mxu0 %v769
    %982 = vmatpush1.bf16.msra.mxu0 %v768
    %983 = vmatprep.subr.bf16.mxu0 %v777
    %984 = vmatpush1.bf16.msra.mxu0 %v776
    %985 = vmatprep.mubr.bf16.mxu0 %v99
    %986 = vmatmul.mubr.bf16.gmra.mrb[0].mxu0 %v98
    %v987 = vpop.f32.mrb[0].mxu0
    %v988 = vadd.f32 %v241, %v987
    %v989 = vpop.f32.mrb[0].mxu0
    %v990 = vadd.f32 %v245, %v989
    %v991 = vpop.f32.mrb[0].mxu0
    %v992 = vadd.f32 %v241, %v991
    %v993 = vpop.f32.mrb[0].mxu0
    %v994 = vadd.f32 %v245, %v993
    %995 = vdwg.mxu0
    %996 = vmatprep.subr.bf16.mxu0 %v659
    %997 = vmatpush1.bf16.msra.mxu0 %v658
    %998 = vmatprep.subr.bf16.mxu0 %v667
    %999 = vmatpush1.bf16.msra.mxu0 %v666
    %1000 = vmatprep.subr.bf16.mxu0 %v675
    %1001 = vmatpush1.bf16.msra.mxu0 %v674
    %1002 = vmatprep.subr.bf16.mxu0 %v683
    %1003 = vmatpush1.bf16.msra.mxu0 %v682
    %1004 = vmatprep.subr.bf16.mxu0 %v691
    %1005 = vmatpush1.bf16.msra.mxu0 %v690
    %1006 = vmatprep.subr.bf16.mxu0 %v699
    %1007 = vmatpush1.bf16.msra.mxu0 %v698
    %1008 = vmatprep.subr.bf16.mxu0 %v707
    %1009 = vmatpush1.bf16.msra.mxu0 %v706
    %1010 = vmatprep.subr.bf16.mxu0 %v715
    %1011 = vmatpush1.bf16.msra.mxu0 %v714
    %1012 = vmatprep.subr.bf16.mxu0 %v723
    %1013 = vmatpush1.bf16.msra.mxu0 %v722
    %1014 = vmatprep.subr.bf16.mxu0 %v731
    %1015 = vmatpush1.bf16.msra.mxu0 %v730
    %1016 = vmatprep.subr.bf16.mxu0 %v739
    %1017 = vmatpush1.bf16.msra.mxu0 %v738
    %1018 = vmatprep.subr.bf16.mxu0 %v747
    %1019 = vmatpush1.bf16.msra.mxu0 %v746
    %1020 = vmatprep.subr.bf16.mxu0 %v755
    %1021 = vmatpush1.bf16.msra.mxu0 %v754
    %1022 = vmatprep.subr.bf16.mxu0 %v763
    %1023 = vmatpush1.bf16.msra.mxu0 %v762
    %1024 = vmatprep.subr.bf16.mxu0 %v771
    %1025 = vmatpush1.bf16.msra.mxu0 %v770
    %1026 = vmatprep.subr.bf16.mxu0 %v779
    %1027 = vmatpush1.bf16.msra.mxu0 %v778
    %1028 = vmatprep.mubr.bf16.mxu0 %v99
    %1029 = vmatmul.mubr.bf16.gmra.mrb[0].mxu0 %v98
    %v1030 = vpop.f32.mrb[0].mxu0
    %v1031 = vadd.f32 %v249, %v1030
    %v1032 = vpop.f32.mrb[0].mxu0
    %v1033 = vadd.f32 %v253, %v1032
    %v1034 = vpop.f32.mrb[0].mxu0
    %v1035 = vadd.f32 %v249, %v1034
    %v1036 = vpop.f32.mrb[0].mxu0
    %v1037 = vadd.f32 %v253, %v1036
    %1038 = vdwg.mxu0
    %1039 = vmatprep.subr.bf16.mxu0 %v661
    %1040 = vmatpush1.bf16.msra.mxu0 %v660
    %1041 = vmatprep.subr.bf16.mxu0 %v669
    %1042 = vmatpush1.bf16.msra.mxu0 %v668
    %1043 = vmatprep.subr.bf16.mxu0 %v677
    %1044 = vmatpush1.bf16.msra.mxu0 %v676
    %1045 = vmatprep.subr.bf16.mxu0 %v685
    %1046 = vmatpush1.bf16.msra.mxu0 %v684
    %1047 = vmatprep.subr.bf16.mxu0 %v693
    %1048 = vmatpush1.bf16.msra.mxu0 %v692
    %1049 = vmatprep.subr.bf16.mxu0 %v701
    %1050 = vmatpush1.bf16.msra.mxu0 %v700
    %1051 = vmatprep.subr.bf16.mxu0 %v709
    %1052 = vmatpush1.bf16.msra.mxu0 %v708
    %1053 = vmatprep.subr.bf16.mxu0 %v717
    %1054 = vmatpush1.bf16.msra.mxu0 %v716
    %1055 = vmatprep.subr.bf16.mxu0 %v725
    %1056 = vmatpush1.bf16.msra.mxu0 %v724
    %1057 = vmatprep.subr.bf16.mxu0 %v733
    %1058 = vmatpush1.bf16.msra.mxu0 %v732
    %1059 = vmatprep.subr.bf16.mxu0 %v741
    %1060 = vmatpush1.bf16.msra.mxu0 %v740
    %1061 = vmatprep.subr.bf16.mxu0 %v749
    %1062 = vmatpush1.bf16.msra.mxu0 %v748
    %1063 = vmatprep.subr.bf16.mxu0 %v757
    %1064 = vmatpush1.bf16.msra.mxu0 %v756
    %1065 = vmatprep.subr.bf16.mxu0 %v765
    %1066 = vmatpush1.bf16.msra.mxu0 %v764
    %1067 = vmatprep.subr.bf16.mxu0 %v773
    %1068 = vmatpush1.bf16.msra.mxu0 %v772
    %1069 = vmatprep.subr.bf16.mxu0 %v781
    %1070 = vmatpush1.bf16.msra.mxu0 %v780
    %1071 = vmatprep.mubr.bf16.mxu0 %v99
    %1072 = vmatmul.mubr.bf16.gmra.mrb[0].mxu0 %v98
    %v1073 = vpop.f32.mrb[0].mxu0
    %v1074 = vadd.f32 %v257, %v1073
    %v1075 = vpop.f32.mrb[0].mxu0
    %v1076 = vadd.f32 %v261, %v1075
    %v1077 = vpop.f32.mrb[0].mxu0
    %v1078 = vadd.f32 %v257, %v1077
    %v1079 = vpop.f32.mrb[0].mxu0
    %v1080 = vadd.f32 %v261, %v1079
    %1081 = vdwg.mxu0
    %v1082 = vmax.f32 %v945, 0.0
    %v1083 = vmax.f32 %v947, 0.0
    %v1084 = vmax.f32 %v988, 0.0
    %v1085 = vmax.f32 %v990, 0.0
    %v1086 = vmax.f32 %v1031, 0.0
    %v1087 = vmax.f32 %v1033, 0.0
    %v1088 = vmax.f32 %v1074, 0.0
    %v1089 = vmax.f32 %v1076, 0.0
    %v1090 = vmax.f32 %v949, 0.0
    %v1091 = vmax.f32 %v951, 0.0
    %v1092 = vmax.f32 %v992, 0.0
    %v1093 = vmax.f32 %v994, 0.0
    %v1094 = vmax.f32 %v1035, 0.0
    %v1095 = vmax.f32 %v1037, 0.0
    %v1096 = vmax.f32 %v1078, 0.0
    %v1097 = vmax.f32 %v1080, 0.0
    %1098 = vrot.lane.b32.xlu0 %v1082, 127
    %v1099 = vpop.permute.xlu0 %1098
    %1100 = vrot.lane.b32.xlu0 %v1090, 127
    %v1101 = vpop.permute.xlu0 %1100
    %1102 = vrot.lane.b32.xlu0 %v1083, 127
    %v1103 = vpop.permute.xlu0 %1102
    %1104 = vrot.lane.b32.xlu0 %v1091, 127
    %v1105 = vpop.permute.xlu0 %1104
    %1106 = vrot.lane.b32.xlu0 %v1084, 127
    %v1107 = vpop.permute.xlu0 %1106
    %1108 = vrot.lane.b32.xlu0 %v1092, 127
    %v1109 = vpop.permute.xlu0 %1108
    %1110 = vrot.lane.b32.xlu0 %v1085, 127
    %v1111 = vpop.permute.xlu0 %1110
    %1112 = vrot.lane.b32.xlu0 %v1093, 127
    %v1113 = vpop.permute.xlu0 %1112
    %1114 = vrot.lane.b32.xlu0 %v1086, 127
    %v1115 = vpop.permute.xlu0 %1114
    %1116 = vrot.lane.b32.xlu0 %v1094, 127
    %v1117 = vpop.permute.xlu0 %1116
    %1118 = vrot.lane.b32.xlu0 %v1087, 127
    %v1119 = vpop.permute.xlu0 %1118
    %1120 = vrot.lane.b32.xlu0 %v1095, 127
    %v1121 = vpop.permute.xlu0 %1120
    %1122 = vrot.lane.b32.xlu0 %v1088, 127
    %v1123 = vpop.permute.xlu0 %1122
    %1124 = vrot.lane.b32.xlu0 %v1096, 127
    %v1125 = vpop.permute.xlu0 %1124
    %1126 = vrot.lane.b32.xlu0 %v1089, 127
    %v1127 = vpop.permute.xlu0 %1126
    %1128 = vrot.lane.b32.xlu0 %v1097, 127
    %v1129 = vpop.permute.xlu0 %1128
    %v1130 = vlaneseq
    %v1131 = vand.u32 %v1130, 127
    %vm1132 = vcmp.lt.s32.totalorder %v1131, 127
    %v1133 = vsel %vm1132, %v1123, %v1127
    %v1134 = vsel %vm1132, %v1125, %v1129
    %v1135 = vsel %vm1132, %v1119, %v1123
    %v1136 = vsel %vm1132, %v1121, %v1125
    %v1137 = vsel %vm1132, %v1115, %v1119
    %v1138 = vsel %vm1132, %v1117, %v1121
    %v1139 = vsel %vm1132, %v1111, %v1115
    %v1140 = vsel %vm1132, %v1113, %v1117
    %v1141 = vsel %vm1132, %v1107, %v1111
    %v1142 = vsel %vm1132, %v1109, %v1113
    %v1143 = vsel %vm1132, %v1103, %v1107
    %v1144 = vsel %vm1132, %v1105, %v1109
    %v1145 = vsel %vm1132, %v1099, %v1103
    %v1146 = vsel %vm1132, %v1101, %v1105
    %v1147 = vsel %vm1132, %v1127, %v1099
    %v1148 = vsel %vm1132, %v1129, %v1101
    %v1149 = vmax.f32 %v1082, %v1145
    %v1150 = vmax.f32 %v1083, %v1143
    %v1151 = vmax.f32 %v1084, %v1141
    %v1152 = vmax.f32 %v1085, %v1139
    %v1153 = vmax.f32 %v1086, %v1137
    %v1154 = vmax.f32 %v1087, %v1135
    %v1155 = vmax.f32 %v1088, %v1133
    %v1156 = vmax.f32 %v1089, %v1147
    %v1157 = vmax.f32 %v1090, %v1146
    %v1158 = vmax.f32 %v1091, %v1144
    %v1159 = vmax.f32 %v1092, %v1142
    %v1160 = vmax.f32 %v1093, %v1140
    %v1161 = vmax.f32 %v1094, %v1138
    %v1162 = vmax.f32 %v1095, %v1136
    %v1163 = vmax.f32 %v1096, %v1134
    %v1164 = vmax.f32 %v1097, %v1148
    %1165 = vrot.lane.b32.xlu0 %v1149, 112
    %v1166 = vpop.permute.xlu0 %1165
    %1167 = vrot.lane.b32.xlu0 %v1157, 112
    %v1168 = vpop.permute.xlu0 %1167
    %1169 = vrot.lane.b32.xlu0 %v1150, 112
    %v1170 = vpop.permute.xlu0 %1169
    %1171 = vrot.lane.b32.xlu0 %v1158, 112
    %v1172 = vpop.permute.xlu0 %1171
    %1173 = vrot.lane.b32.xlu0 %v1151, 112
    %v1174 = vpop.permute.xlu0 %1173
    %1175 = vrot.lane.b32.xlu0 %v1159, 112
    %v1176 = vpop.permute.xlu0 %1175
    %1177 = vrot.lane.b32.xlu0 %v1152, 112
    %v1178 = vpop.permute.xlu0 %1177
    %1179 = vrot.lane.b32.xlu0 %v1160, 112
    %v1180 = vpop.permute.xlu0 %1179
    %1181 = vrot.lane.b32.xlu0 %v1153, 112
    %v1182 = vpop.permute.xlu0 %1181
    %1183 = vrot.lane.b32.xlu0 %v1161, 112
    %v1184 = vpop.permute.xlu0 %1183
    %1185 = vrot.lane.b32.xlu0 %v1154, 112
    %v1186 = vpop.permute.xlu0 %1185
    %1187 = vrot.lane.b32.xlu0 %v1162, 112
    %v1188 = vpop.permute.xlu0 %1187
    %1189 = vrot.lane.b32.xlu0 %v1155, 112
    %v1190 = vpop.permute.xlu0 %1189
    %1191 = vrot.lane.b32.xlu0 %v1163, 112
    %v1192 = vpop.permute.xlu0 %1191
    %1193 = vrot.lane.b32.xlu0 %v1156, 112
    %v1194 = vpop.permute.xlu0 %1193
    %1195 = vrot.lane.b32.xlu0 %v1164, 112
    %v1196 = vpop.permute.xlu0 %1195
    %vm1197 = vcmp.lt.s32.totalorder %v1131, 112
    %v1198 = vsel %vm1197, %v1190, %v1194
    %v1199 = vsel %vm1197, %v1192, %v1196
    %v1200 = vsel %vm1197, %v1186, %v1190
    %v1201 = vsel %vm1197, %v1188, %v1192
    %v1202 = vsel %vm1197, %v1182, %v1186
    %v1203 = vsel %vm1197, %v1184, %v1188
    %v1204 = vsel %vm1197, %v1178, %v1182
    %v1205 = vsel %vm1197, %v1180, %v1184
    %v1206 = vsel %vm1197, %v1174, %v1178
    %v1207 = vsel %vm1197, %v1176, %v1180
    %v1208 = vsel %vm1197, %v1170, %v1174
    %v1209 = vsel %vm1197, %v1172, %v1176
    %v1210 = vsel %vm1197, %v1166, %v1170
    %v1211 = vsel %vm1197, %v1168, %v1172
    %v1212 = vsel %vm1197, %v1194, %v1166
    %v1213 = vsel %vm1197, %v1196, %v1168
    %v1214 = vmax.f32 %v1149, %v1210
    %v1215 = vmax.f32 %v1150, %v1208
    %v1216 = vmax.f32 %v1151, %v1206
    %v1217 = vmax.f32 %v1152, %v1204
    %v1218 = vmax.f32 %v1153, %v1202
    %v1219 = vmax.f32 %v1154, %v1200
    %v1220 = vmax.f32 %v1155, %v1198
    %v1221 = vmax.f32 %v1156, %v1212
    %v1222 = vmax.f32 %v1157, %v1211
    %v1223 = vmax.f32 %v1158, %v1209
    %v1224 = vmax.f32 %v1159, %v1207
    %v1225 = vmax.f32 %v1160, %v1205
    %v1226 = vmax.f32 %v1161, %v1203
    %v1227 = vmax.f32 %v1162, %v1201
    %v1228 = vmax.f32 %v1163, %v1199
    %v1229 = vmax.f32 %v1164, %v1213
    %v1230 = vpack.c.bf16 %v1222, %v1214
    %v1231 = vpack.c.bf16 %v1223, %v1215
    %v1232 = vpack.c.bf16 %v1224, %v1216
    %v1233 = vpack.c.bf16 %v1225, %v1217
    %v1234 = vpack.c.bf16 %v1226, %v1218
    %v1235 = vpack.c.bf16 %v1227, %v1219
    %v1236 = vpack.c.bf16 %v1228, %v1220
    %v1237 = vpack.c.bf16 %v1229, %v1221
    %v1238 = vld [vmem:[#allocation8] sm:$0xff]
    %v1239 = vld [vmem:[#allocation8 + $0x8] sm:$0xff]
    %v1240 = vld [vmem:[#allocation8 + $0x10] sm:$0xff]
    %v1241 = vld [vmem:[#allocation8 + $0x18] sm:$0xff]
    %v1242 = vld [vmem:[#allocation8 + $0x20] sm:$0xff]
    %v1243 = vld [vmem:[#allocation8 + $0x28] sm:$0xff]
    %v1244 = vld [vmem:[#allocation8 + $0x30] sm:$0xff]
    %v1245 = vld [vmem:[#allocation8 + $0x38] sm:$0xff]
    %v1246 = vld [vmem:[#allocation8 + $0x40] sm:$0xff]
    %v1247 = vld [vmem:[#allocation8 + $0x48] sm:$0xff]
    %v1248 = vld [vmem:[#allocation8 + $0x50] sm:$0xff]
    %v1249 = vld [vmem:[#allocation8 + $0x58] sm:$0xff]
    %v1250 = vld [vmem:[#allocation8 + $0x60] sm:$0xff]
    %v1251 = vld [vmem:[#allocation8 + $0x68] sm:$0xff]
    %v1252 = vld [vmem:[#allocation8 + $0x70] sm:$0xff]
    %v1253 = vld [vmem:[#allocation8 + $0x78] sm:$0xff]
    %v1254 = vld [vmem:[#allocation8 + $0x80] sm:$0xff]
    %v1255 = vld [vmem:[#allocation8 + $0x88] sm:$0xff]
    %v1256 = vld [vmem:[#allocation8 + $0x90] sm:$0xff]
    %v1257 = vld [vmem:[#allocation8 + $0x98] sm:$0xff]
    %v1258 = vld [vmem:[#allocation8 + $0xa0] sm:$0xff]
    %v1259 = vld [vmem:[#allocation8 + $0xa8] sm:$0xff]
    %v1260 = vld [vmem:[#allocation8 + $0xb0] sm:$0xff]
    %v1261 = vld [vmem:[#allocation8 + $0xb8] sm:$0xff]
    %v1262 = vld [vmem:[#allocation8 + $0xc0] sm:$0xff]
    %v1263 = vld [vmem:[#allocation8 + $0xc8] sm:$0xff]
    %v1264 = vld [vmem:[#allocation8 + $0xd0] sm:$0xff]
    %v1265 = vld [vmem:[#allocation8 + $0xd8] sm:$0xff]
    %v1266 = vld [vmem:[#allocation8 + $0xe0] sm:$0xff]
    %v1267 = vld [vmem:[#allocation8 + $0xe8] sm:$0xff]
    %v1268 = vld [vmem:[#allocation8 + $0xf0] sm:$0xff]
    %v1269 = vld [vmem:[#allocation8 + $0xf8] sm:$0xff]
    %v1270 = vld [vmem:[#allocation8 + $0x100] sm:$0xff]
    %v1271 = vld [vmem:[#allocation8 + $0x108] sm:$0xff]
    %v1272 = vld [vmem:[#allocation8 + $0x110] sm:$0xff]
    %v1273 = vld [vmem:[#allocation8 + $0x118] sm:$0xff]
    %v1274 = vld [vmem:[#allocation8 + $0x120] sm:$0xff]
    %v1275 = vld [vmem:[#allocation8 + $0x128] sm:$0xff]
    %v1276 = vld [vmem:[#allocation8 + $0x130] sm:$0xff]
    %v1277 = vld [vmem:[#allocation8 + $0x138] sm:$0xff]
    %v1278 = vld [vmem:[#allocation8 + $0x140] sm:$0xff]
    %v1279 = vld [vmem:[#allocation8 + $0x148] sm:$0xff]
    %v1280 = vld [vmem:[#allocation8 + $0x150] sm:$0xff]
    %v1281 = vld [vmem:[#allocation8 + $0x158] sm:$0xff]
    %v1282 = vld [vmem:[#allocation8 + $0x160] sm:$0xff]
    %v1283 = vld [vmem:[#allocation8 + $0x168] sm:$0xff]
    %v1284 = vld [vmem:[#allocation8 + $0x170] sm:$0xff]
    %v1285 = vld [vmem:[#allocation8 + $0x178] sm:$0xff]
    %v1286 = vld [vmem:[#allocation8 + $0x180] sm:$0xff]
    %v1287 = vld [vmem:[#allocation8 + $0x188] sm:$0xff]
    %v1288 = vld [vmem:[#allocation8 + $0x190] sm:$0xff]
    %v1289 = vld [vmem:[#allocation8 + $0x198] sm:$0xff]
    %v1290 = vld [vmem:[#allocation8 + $0x1a0] sm:$0xff]
    %v1291 = vld [vmem:[#allocation8 + $0x1a8] sm:$0xff]
    %v1292 = vld [vmem:[#allocation8 + $0x1b0] sm:$0xff]
    %v1293 = vld [vmem:[#allocation8 + $0x1b8] sm:$0xff]
    %v1294 = vld [vmem:[#allocation8 + $0x1c0] sm:$0xff]
    %v1295 = vld [vmem:[#allocation8 + $0x1c8] sm:$0xff]
    %v1296 = vld [vmem:[#allocation8 + $0x1d0] sm:$0xff]
    %v1297 = vld [vmem:[#allocation8 + $0x1d8] sm:$0xff]
    %v1298 = vld [vmem:[#allocation8 + $0x1e0] sm:$0xff]
    %v1299 = vld [vmem:[#allocation8 + $0x1e8] sm:$0xff]
    %v1300 = vld [vmem:[#allocation8 + $0x1f0] sm:$0xff]
    %v1301 = vld [vmem:[#allocation8 + $0x1f8] sm:$0xff]
    %v1302 = vld [vmem:[#allocation8 + $0x200] sm:$0xff]
    %v1303 = vld [vmem:[#allocation8 + $0x208] sm:$0xff]
    %v1304 = vld [vmem:[#allocation8 + $0x210] sm:$0xff]
    %v1305 = vld [vmem:[#allocation8 + $0x218] sm:$0xff]
    %v1306 = vld [vmem:[#allocation8 + $0x220] sm:$0xff]
    %v1307 = vld [vmem:[#allocation8 + $0x228] sm:$0xff]
    %v1308 = vld [vmem:[#allocation8 + $0x230] sm:$0xff]
    %v1309 = vld [vmem:[#allocation8 + $0x238] sm:$0xff]
    %v1310 = vld [vmem:[#allocation8 + $0x240] sm:$0xff]
    %v1311 = vld [vmem:[#allocation8 + $0x248] sm:$0xff]
    %v1312 = vld [vmem:[#allocation8 + $0x250] sm:$0xff]
    %v1313 = vld [vmem:[#allocation8 + $0x258] sm:$0xff]
    %v1314 = vld [vmem:[#allocation8 + $0x260] sm:$0xff]
    %v1315 = vld [vmem:[#allocation8 + $0x268] sm:$0xff]
    %v1316 = vld [vmem:[#allocation8 + $0x270] sm:$0xff]
    %v1317 = vld [vmem:[#allocation8 + $0x278] sm:$0xff]
    %v1318 = vld [vmem:[#allocation8 + $0x280] sm:$0xff]
    %v1319 = vld [vmem:[#allocation8 + $0x288] sm:$0xff]
    %v1320 = vld [vmem:[#allocation8 + $0x290] sm:$0xff]
    %v1321 = vld [vmem:[#allocation8 + $0x298] sm:$0xff]
    %v1322 = vld [vmem:[#allocation8 + $0x2a0] sm:$0xff]
    %v1323 = vld [vmem:[#allocation8 + $0x2a8] sm:$0xff]
    %v1324 = vld [vmem:[#allocation8 + $0x2b0] sm:$0xff]
    %v1325 = vld [vmem:[#allocation8 + $0x2b8] sm:$0xff]
    %v1326 = vld [vmem:[#allocation8 + $0x2c0] sm:$0xff]
    %v1327 = vld [vmem:[#allocation8 + $0x2c8] sm:$0xff]
    %v1328 = vld [vmem:[#allocation8 + $0x2d0] sm:$0xff]
    %v1329 = vld [vmem:[#allocation8 + $0x2d8] sm:$0xff]
    %v1330 = vld [vmem:[#allocation8 + $0x2e0] sm:$0xff]
    %v1331 = vld [vmem:[#allocation8 + $0x2e8] sm:$0xff]
    %v1332 = vld [vmem:[#allocation8 + $0x2f0] sm:$0xff]
    %v1333 = vld [vmem:[#allocation8 + $0x2f8] sm:$0xff]
    %v1334 = vld [vmem:[#allocation8 + $0x300] sm:$0xff]
    %v1335 = vld [vmem:[#allocation8 + $0x308] sm:$0xff]
    %v1336 = vld [vmem:[#allocation8 + $0x310] sm:$0xff]
    %v1337 = vld [vmem:[#allocation8 + $0x318] sm:$0xff]
    %v1338 = vld [vmem:[#allocation8 + $0x320] sm:$0xff]
    %v1339 = vld [vmem:[#allocation8 + $0x328] sm:$0xff]
    %v1340 = vld [vmem:[#allocation8 + $0x330] sm:$0xff]
    %v1341 = vld [vmem:[#allocation8 + $0x338] sm:$0xff]
    %v1342 = vld [vmem:[#allocation8 + $0x340] sm:$0xff]
    %v1343 = vld [vmem:[#allocation8 + $0x348] sm:$0xff]
    %v1344 = vld [vmem:[#allocation8 + $0x350] sm:$0xff]
    %v1345 = vld [vmem:[#allocation8 + $0x358] sm:$0xff]
    %v1346 = vld [vmem:[#allocation8 + $0x360] sm:$0xff]
    %v1347 = vld [vmem:[#allocation8 + $0x368] sm:$0xff]
    %v1348 = vld [vmem:[#allocation8 + $0x370] sm:$0xff]
    %v1349 = vld [vmem:[#allocation8 + $0x378] sm:$0xff]
    %v1350 = vld [vmem:[#allocation8 + $0x380] sm:$0xff]
    %v1351 = vld [vmem:[#allocation8 + $0x388] sm:$0xff]
    %v1352 = vld [vmem:[#allocation8 + $0x390] sm:$0xff]
    %v1353 = vld [vmem:[#allocation8 + $0x398] sm:$0xff]
    %v1354 = vld [vmem:[#allocation8 + $0x3a0] sm:$0xff]
    %v1355 = vld [vmem:[#allocation8 + $0x3a8] sm:$0xff]
    %v1356 = vld [vmem:[#allocation8 + $0x3b0] sm:$0xff]
    %v1357 = vld [vmem:[#allocation8 + $0x3b8] sm:$0xff]
    %v1358 = vld [vmem:[#allocation8 + $0x3c0] sm:$0xff]
    %v1359 = vld [vmem:[#allocation8 + $0x3c8] sm:$0xff]
    %v1360 = vld [vmem:[#allocation8 + $0x3d0] sm:$0xff]
    %v1361 = vld [vmem:[#allocation8 + $0x3d8] sm:$0xff]
    %v1362 = vld [vmem:[#allocation8 + $0x3e0] sm:$0xff]
    %v1363 = vld [vmem:[#allocation8 + $0x3e8] sm:$0xff]
    %v1364 = vld [vmem:[#allocation8 + $0x3f0] sm:$0xff]
    %v1365 = vld [vmem:[#allocation8 + $0x3f8] sm:$0xff]
    %v1366 = vld [vmem:[%s4] sm:$0x3]
    %v1368 = vlaneseq
    %v1369 = vshrl.u32 %v1368, 7
    %v1370 = vsub.s32 0, %v1369
    %v1371 = vrot.slane %v1366, %v1370
    %v1372 = vlaneseq
    %v1373 = vshrl.u32 %v1372, 7
    %v1374 = vsub.s32 1, %v1373
    %v1375 = vrot.slane %v1366, %v1374
    %v1506 = vunpack.c.l.b16 %v1238
    %v1507 = vunpack.c.h.b16 %v1238
    %v1508 = vunpack.c.l.b16 %v1239
    %v1509 = vunpack.c.h.b16 %v1239
    %v1510 = vunpack.c.l.b16 %v1240
    %v1511 = vunpack.c.h.b16 %v1240
    %v1512 = vunpack.c.l.b16 %v1241
    %v1513 = vunpack.c.h.b16 %v1241
    %v1514 = vunpack.c.l.b16 %v1242
    %v1515 = vunpack.c.h.b16 %v1242
    %v1516 = vunpack.c.l.b16 %v1243
    %v1517 = vunpack.c.h.b16 %v1243
    %v1518 = vunpack.c.l.b16 %v1244
    %v1519 = vunpack.c.h.b16 %v1244
    %v1520 = vunpack.c.l.b16 %v1245
    %v1521 = vunpack.c.h.b16 %v1245
    %v1522 = vunpack.c.l.b16 %v1246
    %v1523 = vunpack.c.h.b16 %v1246
    %v1524 = vunpack.c.l.b16 %v1247
    %v1525 = vunpack.c.h.b16 %v1247
    %v1526 = vunpack.c.l.b16 %v1248
    %v1527 = vunpack.c.h.b16 %v1248
    %v1528 = vunpack.c.l.b16 %v1249
    %v1529 = vunpack.c.h.b16 %v1249
    %v1530 = vunpack.c.l.b16 %v1250
    %v1531 = vunpack.c.h.b16 %v1250
    %v1532 = vunpack.c.l.b16 %v1251
    %v1533 = vunpack.c.h.b16 %v1251
    %v1534 = vunpack.c.l.b16 %v1252
    %v1535 = vunpack.c.h.b16 %v1252
    %v1536 = vunpack.c.l.b16 %v1253
    %v1537 = vunpack.c.h.b16 %v1253
    %v1538 = vunpack.c.l.b16 %v1254
    %v1539 = vunpack.c.h.b16 %v1254
    %v1540 = vunpack.c.l.b16 %v1255
    %v1541 = vunpack.c.h.b16 %v1255
    %v1542 = vunpack.c.l.b16 %v1256
    %v1543 = vunpack.c.h.b16 %v1256
    %v1544 = vunpack.c.l.b16 %v1257
    %v1545 = vunpack.c.h.b16 %v1257
    %v1546 = vunpack.c.l.b16 %v1258
    %v1547 = vunpack.c.h.b16 %v1258
    %v1548 = vunpack.c.l.b16 %v1259
    %v1549 = vunpack.c.h.b16 %v1259
    %v1550 = vunpack.c.l.b16 %v1260
    %v1551 = vunpack.c.h.b16 %v1260
    %v1552 = vunpack.c.l.b16 %v1261
    %v1553 = vunpack.c.h.b16 %v1261
    %v1554 = vunpack.c.l.b16 %v1262
    %v1555 = vunpack.c.h.b16 %v1262
    %v1556 = vunpack.c.l.b16 %v1263
    %v1557 = vunpack.c.h.b16 %v1263
    %v1558 = vunpack.c.l.b16 %v1264
    %v1559 = vunpack.c.h.b16 %v1264
    %v1560 = vunpack.c.l.b16 %v1265
    %v1561 = vunpack.c.h.b16 %v1265
    %v1562 = vunpack.c.l.b16 %v1266
    %v1563 = vunpack.c.h.b16 %v1266
    %v1564 = vunpack.c.l.b16 %v1267
    %v1565 = vunpack.c.h.b16 %v1267
    %v1566 = vunpack.c.l.b16 %v1268
    %v1567 = vunpack.c.h.b16 %v1268
    %v1568 = vunpack.c.l.b16 %v1269
    %v1569 = vunpack.c.h.b16 %v1269
    %v1570 = vunpack.c.l.b16 %v1270
    %v1571 = vunpack.c.h.b16 %v1270
    %v1572 = vunpack.c.l.b16 %v1271
    %v1573 = vunpack.c.h.b16 %v1271
    %v1574 = vunpack.c.l.b16 %v1272
    %v1575 = vunpack.c.h.b16 %v1272
    %v1576 = vunpack.c.l.b16 %v1273
    %v1577 = vunpack.c.h.b16 %v1273
    %v1578 = vunpack.c.l.b16 %v1274
    %v1579 = vunpack.c.h.b16 %v1274
    %v1580 = vunpack.c.l.b16 %v1275
    %v1581 = vunpack.c.h.b16 %v1275
    %v1582 = vunpack.c.l.b16 %v1276
    %v1583 = vunpack.c.h.b16 %v1276
    %v1584 = vunpack.c.l.b16 %v1277
    %v1585 = vunpack.c.h.b16 %v1277
    %v1586 = vunpack.c.l.b16 %v1278
    %v1587 = vunpack.c.h.b16 %v1278
    %v1588 = vunpack.c.l.b16 %v1279
    %v1589 = vunpack.c.h.b16 %v1279
    %v1590 = vunpack.c.l.b16 %v1280
    %v1591 = vunpack.c.h.b16 %v1280
    %v1592 = vunpack.c.l.b16 %v1281
    %v1593 = vunpack.c.h.b16 %v1281
    %v1594 = vunpack.c.l.b16 %v1282
    %v1595 = vunpack.c.h.b16 %v1282
    %v1596 = vunpack.c.l.b16 %v1283
    %v1597 = vunpack.c.h.b16 %v1283
    %v1598 = vunpack.c.l.b16 %v1284
    %v1599 = vunpack.c.h.b16 %v1284
    %v1600 = vunpack.c.l.b16 %v1285
    %v1601 = vunpack.c.h.b16 %v1285
    %v1602 = vunpack.c.l.b16 %v1286
    %v1603 = vunpack.c.h.b16 %v1286
    %v1604 = vunpack.c.l.b16 %v1287
    %v1605 = vunpack.c.h.b16 %v1287
    %v1606 = vunpack.c.l.b16 %v1288
    %v1607 = vunpack.c.h.b16 %v1288
    %v1608 = vunpack.c.l.b16 %v1289
    %v1609 = vunpack.c.h.b16 %v1289
    %v1610 = vunpack.c.l.b16 %v1290
    %v1611 = vunpack.c.h.b16 %v1290
    %v1612 = vunpack.c.l.b16 %v1291
    %v1613 = vunpack.c.h.b16 %v1291
    %v1614 = vunpack.c.l.b16 %v1292
    %v1615 = vunpack.c.h.b16 %v1292
    %v1616 = vunpack.c.l.b16 %v1293
    %v1617 = vunpack.c.h.b16 %v1293
    %v1618 = vunpack.c.l.b16 %v1294
    %v1619 = vunpack.c.h.b16 %v1294
    %v1620 = vunpack.c.l.b16 %v1295
    %v1621 = vunpack.c.h.b16 %v1295
    %v1622 = vunpack.c.l.b16 %v1296
    %v1623 = vunpack.c.h.b16 %v1296
    %v1624 = vunpack.c.l.b16 %v1297
    %v1625 = vunpack.c.h.b16 %v1297
    %v1626 = vunpack.c.l.b16 %v1298
    %v1627 = vunpack.c.h.b16 %v1298
    %v1628 = vunpack.c.l.b16 %v1299
    %v1629 = vunpack.c.h.b16 %v1299
    %v1630 = vunpack.c.l.b16 %v1300
    %v1631 = vunpack.c.h.b16 %v1300
    %v1632 = vunpack.c.l.b16 %v1301
    %v1633 = vunpack.c.h.b16 %v1301
    %v1634 = vunpack.c.l.b16 %v1302
    %v1635 = vunpack.c.h.b16 %v1302
    %v1636 = vunpack.c.l.b16 %v1303
    %v1637 = vunpack.c.h.b16 %v1303
    %v1638 = vunpack.c.l.b16 %v1304
    %v1639 = vunpack.c.h.b16 %v1304
    %v1640 = vunpack.c.l.b16 %v1305
    %v1641 = vunpack.c.h.b16 %v1305
    %v1642 = vunpack.c.l.b16 %v1306
    %v1643 = vunpack.c.h.b16 %v1306
    %v1644 = vunpack.c.l.b16 %v1307
    %v1645 = vunpack.c.h.b16 %v1307
    %v1646 = vunpack.c.l.b16 %v1308
    %v1647 = vunpack.c.h.b16 %v1308
    %v1648 = vunpack.c.l.b16 %v1309
    %v1649 = vunpack.c.h.b16 %v1309
    %v1650 = vunpack.c.l.b16 %v1310
    %v1651 = vunpack.c.h.b16 %v1310
    %v1652 = vunpack.c.l.b16 %v1311
    %v1653 = vunpack.c.h.b16 %v1311
    %v1654 = vunpack.c.l.b16 %v1312
    %v1655 = vunpack.c.h.b16 %v1312
    %v1656 = vunpack.c.l.b16 %v1313
    %v1657 = vunpack.c.h.b16 %v1313
    %v1658 = vunpack.c.l.b16 %v1314
    %v1659 = vunpack.c.h.b16 %v1314
    %v1660 = vunpack.c.l.b16 %v1315
    %v1661 = vunpack.c.h.b16 %v1315
    %v1662 = vunpack.c.l.b16 %v1316
    %v1663 = vunpack.c.h.b16 %v1316
    %v1664 = vunpack.c.l.b16 %v1317
    %v1665 = vunpack.c.h.b16 %v1317
    %v1666 = vunpack.c.l.b16 %v1318
    %v1667 = vunpack.c.h.b16 %v1318
    %v1668 = vunpack.c.l.b16 %v1319
    %v1669 = vunpack.c.h.b16 %v1319
    %v1670 = vunpack.c.l.b16 %v1320
    %v1671 = vunpack.c.h.b16 %v1320
    %v1672 = vunpack.c.l.b16 %v1321
    %v1673 = vunpack.c.h.b16 %v1321
    %v1674 = vunpack.c.l.b16 %v1322
    %v1675 = vunpack.c.h.b16 %v1322
    %v1676 = vunpack.c.l.b16 %v1323
    %v1677 = vunpack.c.h.b16 %v1323
    %v1678 = vunpack.c.l.b16 %v1324
    %v1679 = vunpack.c.h.b16 %v1324
    %v1680 = vunpack.c.l.b16 %v1325
    %v1681 = vunpack.c.h.b16 %v1325
    %v1682 = vunpack.c.l.b16 %v1326
    %v1683 = vunpack.c.h.b16 %v1326
    %v1684 = vunpack.c.l.b16 %v1327
    %v1685 = vunpack.c.h.b16 %v1327
    %v1686 = vunpack.c.l.b16 %v1328
    %v1687 = vunpack.c.h.b16 %v1328
    %v1688 = vunpack.c.l.b16 %v1329
    %v1689 = vunpack.c.h.b16 %v1329
    %v1690 = vunpack.c.l.b16 %v1330
    %v1691 = vunpack.c.h.b16 %v1330
    %v1692 = vunpack.c.l.b16 %v1331
    %v1693 = vunpack.c.h.b16 %v1331
    %v1694 = vunpack.c.l.b16 %v1332
    %v1695 = vunpack.c.h.b16 %v1332
    %v1696 = vunpack.c.l.b16 %v1333
    %v1697 = vunpack.c.h.b16 %v1333
    %v1698 = vunpack.c.l.b16 %v1334
    %v1699 = vunpack.c.h.b16 %v1334
    %v1700 = vunpack.c.l.b16 %v1335
    %v1701 = vunpack.c.h.b16 %v1335
    %v1702 = vunpack.c.l.b16 %v1336
    %v1703 = vunpack.c.h.b16 %v1336
    %v1704 = vunpack.c.l.b16 %v1337
    %v1705 = vunpack.c.h.b16 %v1337
    %v1706 = vunpack.c.l.b16 %v1338
    %v1707 = vunpack.c.h.b16 %v1338
    %v1708 = vunpack.c.l.b16 %v1339
    %v1709 = vunpack.c.h.b16 %v1339
    %v1710 = vunpack.c.l.b16 %v1340
    %v1711 = vunpack.c.h.b16 %v1340
    %v1712 = vunpack.c.l.b16 %v1341
    %v1713 = vunpack.c.h.b16 %v1341
    %v1714 = vunpack.c.l.b16 %v1342
    %v1715 = vunpack.c.h.b16 %v1342
    %v1716 = vunpack.c.l.b16 %v1343
    %v1717 = vunpack.c.h.b16 %v1343
    %v1718 = vunpack.c.l.b16 %v1344
    %v1719 = vunpack.c.h.b16 %v1344
    %v1720 = vunpack.c.l.b16 %v1345
    %v1721 = vunpack.c.h.b16 %v1345
    %v1722 = vunpack.c.l.b16 %v1346
    %v1723 = vunpack.c.h.b16 %v1346
    %v1724 = vunpack.c.l.b16 %v1347
    %v1725 = vunpack.c.h.b16 %v1347
    %v1726 = vunpack.c.l.b16 %v1348
    %v1727 = vunpack.c.h.b16 %v1348
    %v1728 = vunpack.c.l.b16 %v1349
    %v1729 = vunpack.c.h.b16 %v1349
    %v1730 = vunpack.c.l.b16 %v1350
    %v1731 = vunpack.c.h.b16 %v1350
    %v1732 = vunpack.c.l.b16 %v1351
    %v1733 = vunpack.c.h.b16 %v1351
    %v1734 = vunpack.c.l.b16 %v1352
    %v1735 = vunpack.c.h.b16 %v1352
    %v1736 = vunpack.c.l.b16 %v1353
    %v1737 = vunpack.c.h.b16 %v1353
    %v1738 = vunpack.c.l.b16 %v1354
    %v1739 = vunpack.c.h.b16 %v1354
    %v1740 = vunpack.c.l.b16 %v1355
    %v1741 = vunpack.c.h.b16 %v1355
    %v1742 = vunpack.c.l.b16 %v1356
    %v1743 = vunpack.c.h.b16 %v1356
    %v1744 = vunpack.c.l.b16 %v1357
    %v1745 = vunpack.c.h.b16 %v1357
    %v1746 = vunpack.c.l.b16 %v1358
    %v1747 = vunpack.c.h.b16 %v1358
    %v1748 = vunpack.c.l.b16 %v1359
    %v1749 = vunpack.c.h.b16 %v1359
    %v1750 = vunpack.c.l.b16 %v1360
    %v1751 = vunpack.c.h.b16 %v1360
    %v1752 = vunpack.c.l.b16 %v1361
    %v1753 = vunpack.c.h.b16 %v1361
    %v1754 = vunpack.c.l.b16 %v1362
    %v1755 = vunpack.c.h.b16 %v1362
    %v1756 = vunpack.c.l.b16 %v1363
    %v1757 = vunpack.c.h.b16 %v1363
    %v1758 = vunpack.c.l.b16 %v1364
    %v1759 = vunpack.c.h.b16 %v1364
    %v1760 = vunpack.c.l.b16 %v1365
    %v1761 = vunpack.c.h.b16 %v1365
    %v1762 = vpack.c.b16 %v1508, %v1506
    %v1763 = vpack.c.b16 %v1509, %v1507
    %v1764 = vpack.c.b16 %v1512, %v1510
    %v1765 = vpack.c.b16 %v1513, %v1511
    %v1766 = vpack.c.b16 %v1516, %v1514
    %v1767 = vpack.c.b16 %v1517, %v1515
    %v1768 = vpack.c.b16 %v1520, %v1518
    %v1769 = vpack.c.b16 %v1521, %v1519
    %v1770 = vpack.c.b16 %v1524, %v1522
    %v1771 = vpack.c.b16 %v1525, %v1523
    %v1772 = vpack.c.b16 %v1528, %v1526
    %v1773 = vpack.c.b16 %v1529, %v1527
    %v1774 = vpack.c.b16 %v1532, %v1530
    %v1775 = vpack.c.b16 %v1533, %v1531
    %v1776 = vpack.c.b16 %v1536, %v1534
    %v1777 = vpack.c.b16 %v1537, %v1535
    %v1778 = vpack.c.b16 %v1540, %v1538
    %v1779 = vpack.c.b16 %v1541, %v1539
    %v1780 = vpack.c.b16 %v1544, %v1542
    %v1781 = vpack.c.b16 %v1545, %v1543
    %v1782 = vpack.c.b16 %v1548, %v1546
    %v1783 = vpack.c.b16 %v1549, %v1547
    %v1784 = vpack.c.b16 %v1552, %v1550
    %v1785 = vpack.c.b16 %v1553, %v1551
    %v1786 = vpack.c.b16 %v1556, %v1554
    %v1787 = vpack.c.b16 %v1557, %v1555
    %v1788 = vpack.c.b16 %v1560, %v1558
    %v1789 = vpack.c.b16 %v1561, %v1559
    %v1790 = vpack.c.b16 %v1564, %v1562
    %v1791 = vpack.c.b16 %v1565, %v1563
    %v1792 = vpack.c.b16 %v1568, %v1566
    %v1793 = vpack.c.b16 %v1569, %v1567
    %v1794 = vpack.c.b16 %v1572, %v1570
    %v1795 = vpack.c.b16 %v1573, %v1571
    %v1796 = vpack.c.b16 %v1576, %v1574
    %v1797 = vpack.c.b16 %v1577, %v1575
    %v1798 = vpack.c.b16 %v1580, %v1578
    %v1799 = vpack.c.b16 %v1581, %v1579
    %v1800 = vpack.c.b16 %v1584, %v1582
    %v1801 = vpack.c.b16 %v1585, %v1583
    %v1802 = vpack.c.b16 %v1588, %v1586
    %v1803 = vpack.c.b16 %v1589, %v1587
    %v1804 = vpack.c.b16 %v1592, %v1590
    %v1805 = vpack.c.b16 %v1593, %v1591
    %v1806 = vpack.c.b16 %v1596, %v1594
    %v1807 = vpack.c.b16 %v1597, %v1595
    %v1808 = vpack.c.b16 %v1600, %v1598
    %v1809 = vpack.c.b16 %v1601, %v1599
    %v1810 = vpack.c.b16 %v1604, %v1602
    %v1811 = vpack.c.b16 %v1605, %v1603
    %v1812 = vpack.c.b16 %v1608, %v1606
    %v1813 = vpack.c.b16 %v1609, %v1607
    %v1814 = vpack.c.b16 %v1612, %v1610
    %v1815 = vpack.c.b16 %v1613, %v1611
    %v1816 = vpack.c.b16 %v1616, %v1614
    %v1817 = vpack.c.b16 %v1617, %v1615
    %v1818 = vpack.c.b16 %v1620, %v1618
    %v1819 = vpack.c.b16 %v1621, %v1619
    %v1820 = vpack.c.b16 %v1624, %v1622
    %v1821 = vpack.c.b16 %v1625, %v1623
    %v1822 = vpack.c.b16 %v1628, %v1626
    %v1823 = vpack.c.b16 %v1629, %v1627
    %v1824 = vpack.c.b16 %v1632, %v1630
    %v1825 = vpack.c.b16 %v1633, %v1631
    %v1826 = vpack.c.b16 %v1636, %v1634
    %v1827 = vpack.c.b16 %v1637, %v1635
    %v1828 = vpack.c.b16 %v1640, %v1638
    %v1829 = vpack.c.b16 %v1641, %v1639
    %v1830 = vpack.c.b16 %v1644, %v1642
    %v1831 = vpack.c.b16 %v1645, %v1643
    %v1832 = vpack.c.b16 %v1648, %v1646
    %v1833 = vpack.c.b16 %v1649, %v1647
    %v1834 = vpack.c.b16 %v1652, %v1650
    %v1835 = vpack.c.b16 %v1653, %v1651
    %v1836 = vpack.c.b16 %v1656, %v1654
    %v1837 = vpack.c.b16 %v1657, %v1655
    %v1838 = vpack.c.b16 %v1660, %v1658
    %v1839 = vpack.c.b16 %v1661, %v1659
    %v1840 = vpack.c.b16 %v1664, %v1662
    %v1841 = vpack.c.b16 %v1665, %v1663
    %v1842 = vpack.c.b16 %v1668, %v1666
    %v1843 = vpack.c.b16 %v1669, %v1667
    %v1844 = vpack.c.b16 %v1672, %v1670
    %v1845 = vpack.c.b16 %v1673, %v1671
    %v1846 = vpack.c.b16 %v1676, %v1674
    %v1847 = vpack.c.b16 %v1677, %v1675
    %v1848 = vpack.c.b16 %v1680, %v1678
    %v1849 = vpack.c.b16 %v1681, %v1679
    %v1850 = vpack.c.b16 %v1684, %v1682
    %v1851 = vpack.c.b16 %v1685, %v1683
    %v1852 = vpack.c.b16 %v1688, %v1686
    %v1853 = vpack.c.b16 %v1689, %v1687
    %v1854 = vpack.c.b16 %v1692, %v1690
    %v1855 = vpack.c.b16 %v1693, %v1691
    %v1856 = vpack.c.b16 %v1696, %v1694
    %v1857 = vpack.c.b16 %v1697, %v1695
    %v1858 = vpack.c.b16 %v1700, %v1698
    %v1859 = vpack.c.b16 %v1701, %v1699
    %v1860 = vpack.c.b16 %v1704, %v1702
    %v1861 = vpack.c.b16 %v1705, %v1703
    %v1862 = vpack.c.b16 %v1708, %v1706
    %v1863 = vpack.c.b16 %v1709, %v1707
    %v1864 = vpack.c.b16 %v1712, %v1710
    %v1865 = vpack.c.b16 %v1713, %v1711
    %v1866 = vpack.c.b16 %v1716, %v1714
    %v1867 = vpack.c.b16 %v1717, %v1715
    %v1868 = vpack.c.b16 %v1720, %v1718
    %v1869 = vpack.c.b16 %v1721, %v1719
    %v1870 = vpack.c.b16 %v1724, %v1722
    %v1871 = vpack.c.b16 %v1725, %v1723
    %v1872 = vpack.c.b16 %v1728, %v1726
    %v1873 = vpack.c.b16 %v1729, %v1727
    %v1874 = vpack.c.b16 %v1732, %v1730
    %v1875 = vpack.c.b16 %v1733, %v1731
    %v1876 = vpack.c.b16 %v1736, %v1734
    %v1877 = vpack.c.b16 %v1737, %v1735
    %v1878 = vpack.c.b16 %v1740, %v1738
    %v1879 = vpack.c.b16 %v1741, %v1739
    %v1880 = vpack.c.b16 %v1744, %v1742
    %v1881 = vpack.c.b16 %v1745, %v1743
    %v1882 = vpack.c.b16 %v1748, %v1746
    %v1883 = vpack.c.b16 %v1749, %v1747
    %v1884 = vpack.c.b16 %v1752, %v1750
    %v1885 = vpack.c.b16 %v1753, %v1751
    %v1886 = vpack.c.b16 %v1756, %v1754
    %v1887 = vpack.c.b16 %v1757, %v1755
    %v1888 = vpack.c.b16 %v1760, %v1758
    %v1889 = vpack.c.b16 %v1761, %v1759
    %2018 = vmatprep.subr.bf16.mxu0 %v1763
    %2019 = vmatpush1.bf16.msra.mxu0 %v1762
    %2020 = vmatprep.subr.bf16.mxu0 %v1765
    %2021 = vmatpush1.bf16.msra.mxu0 %v1764
    %2022 = vmatprep.subr.bf16.mxu0 %v1767
    %2023 = vmatpush1.bf16.msra.mxu0 %v1766
    %2024 = vmatprep.subr.bf16.mxu0 %v1769
    %2025 = vmatpush1.bf16.msra.mxu0 %v1768
    %2026 = vmatprep.subr.bf16.mxu0 %v1771
    %2027 = vmatpush1.bf16.msra.mxu0 %v1770
    %2028 = vmatprep.subr.bf16.mxu0 %v1773
    %2029 = vmatpush1.bf16.msra.mxu0 %v1772
    %2030 = vmatprep.subr.bf16.mxu0 %v1775
    %2031 = vmatpush1.bf16.msra.mxu0 %v1774
    %2032 = vmatprep.subr.bf16.mxu0 %v1777
    %2033 = vmatpush1.bf16.msra.mxu0 %v1776
    %2034 = vmatprep.subr.bf16.mxu0 %v1779
    %2035 = vmatpush1.bf16.msra.mxu0 %v1778
    %2036 = vmatprep.subr.bf16.mxu0 %v1781
    %2037 = vmatpush1.bf16.msra.mxu0 %v1780
    %2038 = vmatprep.subr.bf16.mxu0 %v1783
    %2039 = vmatpush1.bf16.msra.mxu0 %v1782
    %2040 = vmatprep.subr.bf16.mxu0 %v1785
    %2041 = vmatpush1.bf16.msra.mxu0 %v1784
    %2042 = vmatprep.subr.bf16.mxu0 %v1787
    %2043 = vmatpush1.bf16.msra.mxu0 %v1786
    %2044 = vmatprep.subr.bf16.mxu0 %v1789
    %2045 = vmatpush1.bf16.msra.mxu0 %v1788
    %2046 = vmatprep.subr.bf16.mxu0 %v1791
    %2047 = vmatpush1.bf16.msra.mxu0 %v1790
    %2048 = vmatprep.subr.bf16.mxu0 %v1793
    %2049 = vmatpush1.bf16.msra.mxu0 %v1792
    %2050 = vmatprep.mubr.bf16.mxu0 %v1231
    %2051 = vmatmul.mubr.bf16.gmra.mrb[0].mxu0 %v1230
    %v2052 = vpop.f32.mrb[0].mxu0
    %v2053 = vadd.f32 %v1371, %v2052
    %v2054 = vpop.f32.mrb[0].mxu0
    %v2055 = vadd.f32 %v1375, %v2054
    %v2056 = vpop.f32.mrb[0].mxu0
    %v2057 = vadd.f32 %v1371, %v2056
    %v2058 = vpop.f32.mrb[0].mxu0
    %v2059 = vadd.f32 %v1375, %v2058
    %2060 = vdwg.mxu0
    %2061 = vmatprep.subr.bf16.mxu0 %v1795
    %2062 = vmatpush1.bf16.msra.mxu0 %v1794
    %2063 = vmatprep.subr.bf16.mxu0 %v1797
    %2064 = vmatpush1.bf16.msra.mxu0 %v1796
    %2065 = vmatprep.subr.bf16.mxu0 %v1799
    %2066 = vmatpush1.bf16.msra.mxu0 %v1798
    %2067 = vmatprep.subr.bf16.mxu0 %v1801
    %2068 = vmatpush1.bf16.msra.mxu0 %v1800
    %2069 = vmatprep.subr.bf16.mxu0 %v1803
    %2070 = vmatpush1.bf16.msra.mxu0 %v1802
    %2071 = vmatprep.subr.bf16.mxu0 %v1805
    %2072 = vmatpush1.bf16.msra.mxu0 %v1804
    %2073 = vmatprep.subr.bf16.mxu0 %v1807
    %2074 = vmatpush1.bf16.msra.mxu0 %v1806
    %2075 = vmatprep.subr.bf16.mxu0 %v1809
    %2076 = vmatpush1.bf16.msra.mxu0 %v1808
    %2077 = vmatprep.subr.bf16.mxu0 %v1811
    %2078 = vmatpush1.bf16.msra.mxu0 %v1810
    %2079 = vmatprep.subr.bf16.mxu0 %v1813
    %2080 = vmatpush1.bf16.msra.mxu0 %v1812
    %2081 = vmatprep.subr.bf16.mxu0 %v1815
    %2082 = vmatpush1.bf16.msra.mxu0 %v1814
    %2083 = vmatprep.subr.bf16.mxu0 %v1817
    %2084 = vmatpush1.bf16.msra.mxu0 %v1816
    %2085 = vmatprep.subr.bf16.mxu0 %v1819
    %2086 = vmatpush1.bf16.msra.mxu0 %v1818
    %2087 = vmatprep.subr.bf16.mxu0 %v1821
    %2088 = vmatpush1.bf16.msra.mxu0 %v1820
    %2089 = vmatprep.subr.bf16.mxu0 %v1823
    %2090 = vmatpush1.bf16.msra.mxu0 %v1822
    %2091 = vmatprep.subr.bf16.mxu0 %v1825
    %2092 = vmatpush1.bf16.msra.mxu0 %v1824
    %2093 = vmatprep.mubr.bf16.mxu0 %v1233
    %2094 = vmatmul.mubr.bf16.gmra.mrb[0].mxu0 %v1232
    %v2095 = vpop.f32.mrb[0].mxu0
    %v2096 = vadd.f32 %v2053, %v2095
    %v2097 = vpop.f32.mrb[0].mxu0
    %v2098 = vadd.f32 %v2055, %v2097
    %v2099 = vpop.f32.mrb[0].mxu0
    %v2100 = vadd.f32 %v2057, %v2099
    %v2101 = vpop.f32.mrb[0].mxu0
    %v2102 = vadd.f32 %v2059, %v2101
    %2103 = vdwg.mxu0
    %2104 = vmatprep.subr.bf16.mxu0 %v1827
    %2105 = vmatpush1.bf16.msra.mxu0 %v1826
    %2106 = vmatprep.subr.bf16.mxu0 %v1829
    %2107 = vmatpush1.bf16.msra.mxu0 %v1828
    %2108 = vmatprep.subr.bf16.mxu0 %v1831
    %2109 = vmatpush1.bf16.msra.mxu0 %v1830
    %2110 = vmatprep.subr.bf16.mxu0 %v1833
    %2111 = vmatpush1.bf16.msra.mxu0 %v1832
    %2112 = vmatprep.subr.bf16.mxu0 %v1835
    %2113 = vmatpush1.bf16.msra.mxu0 %v1834
    %2114 = vmatprep.subr.bf16.mxu0 %v1837
    %2115 = vmatpush1.bf16.msra.mxu0 %v1836
    %2116 = vmatprep.subr.bf16.mxu0 %v1839
    %2117 = vmatpush1.bf16.msra.mxu0 %v1838
    %2118 = vmatprep.subr.bf16.mxu0 %v1841
    %2119 = vmatpush1.bf16.msra.mxu0 %v1840
    %2120 = vmatprep.subr.bf16.mxu0 %v1843
    %2121 = vmatpush1.bf16.msra.mxu0 %v1842
    %2122 = vmatprep.subr.bf16.mxu0 %v1845
    %2123 = vmatpush1.bf16.msra.mxu0 %v1844
    %2124 = vmatprep.subr.bf16.mxu0 %v1847
    %2125 = vmatpush1.bf16.msra.mxu0 %v1846
    %2126 = vmatprep.subr.bf16.mxu0 %v1849
    %2127 = vmatpush1.bf16.msra.mxu0 %v1848
    %2128 = vmatprep.subr.bf16.mxu0 %v1851
    %2129 = vmatpush1.bf16.msra.mxu0 %v1850
    %2130 = vmatprep.subr.bf16.mxu0 %v1853
    %2131 = vmatpush1.bf16.msra.mxu0 %v1852
    %2132 = vmatprep.subr.bf16.mxu0 %v1855
    %2133 = vmatpush1.bf16.msra.mxu0 %v1854
    %2134 = vmatprep.subr.bf16.mxu0 %v1857
    %2135 = vmatpush1.bf16.msra.mxu0 %v1856
    %2136 = vmatprep.mubr.bf16.mxu0 %v1235
    %2137 = vmatmul.mubr.bf16.gmra.mrb[0].mxu0 %v1234
    %v2138 = vpop.f32.mrb[0].mxu0
    %v2139 = vadd.f32 %v2096, %v2138
    %v2140 = vpop.f32.mrb[0].mxu0
    %v2141 = vadd.f32 %v2098, %v2140
    %v2142 = vpop.f32.mrb[0].mxu0
    %v2143 = vadd.f32 %v2100, %v2142
    %v2144 = vpop.f32.mrb[0].mxu0
    %v2145 = vadd.f32 %v2102, %v2144
    %2146 = vdwg.mxu0
    %2147 = vmatprep.subr.bf16.mxu0 %v1859
    %2148 = vmatpush1.bf16.msra.mxu0 %v1858
    %2149 = vmatprep.subr.bf16.mxu0 %v1861
    %2150 = vmatpush1.bf16.msra.mxu0 %v1860
    %2151 = vmatprep.subr.bf16.mxu0 %v1863
    %2152 = vmatpush1.bf16.msra.mxu0 %v1862
    %2153 = vmatprep.subr.bf16.mxu0 %v1865
    %2154 = vmatpush1.bf16.msra.mxu0 %v1864
    %2155 = vmatprep.subr.bf16.mxu0 %v1867
    %2156 = vmatpush1.bf16.msra.mxu0 %v1866
    %2157 = vmatprep.subr.bf16.mxu0 %v1869
    %2158 = vmatpush1.bf16.msra.mxu0 %v1868
    %2159 = vmatprep.subr.bf16.mxu0 %v1871
    %2160 = vmatpush1.bf16.msra.mxu0 %v1870
    %2161 = vmatprep.subr.bf16.mxu0 %v1873
    %2162 = vmatpush1.bf16.msra.mxu0 %v1872
    %2163 = vmatprep.subr.bf16.mxu0 %v1875
    %2164 = vmatpush1.bf16.msra.mxu0 %v1874
    %2165 = vmatprep.subr.bf16.mxu0 %v1877
    %2166 = vmatpush1.bf16.msra.mxu0 %v1876
    %2167 = vmatprep.subr.bf16.mxu0 %v1879
    %2168 = vmatpush1.bf16.msra.mxu0 %v1878
    %2169 = vmatprep.subr.bf16.mxu0 %v1881
    %2170 = vmatpush1.bf16.msra.mxu0 %v1880
    %2171 = vmatprep.subr.bf16.mxu0 %v1883
    %2172 = vmatpush1.bf16.msra.mxu0 %v1882
    %2173 = vmatprep.subr.bf16.mxu0 %v1885
    %2174 = vmatpush1.bf16.msra.mxu0 %v1884
    %2175 = vmatprep.subr.bf16.mxu0 %v1887
    %2176 = vmatpush1.bf16.msra.mxu0 %v1886
    %2177 = vmatprep.subr.bf16.mxu0 %v1889
    %2178 = vmatpush1.bf16.msra.mxu0 %v1888
    %2179 = vmatprep.mubr.bf16.mxu0 %v1237
    %2180 = vmatmul.mubr.bf16.gmra.mrb[0].mxu0 %v1236
    %v2181 = vpop.f32.mrb[0].mxu0
    %v2182 = vadd.f32 %v2139, %v2181
    %v2183 = vpop.f32.mrb[0].mxu0
    %v2184 = vadd.f32 %v2141, %v2183
    %v2185 = vpop.f32.mrb[0].mxu0
    %v2186 = vadd.f32 %v2143, %v2185
    %v2187 = vpop.f32.mrb[0].mxu0
    %v2188 = vadd.f32 %v2145, %v2187
    %2189 = vdwg.mxu0
    %v2190 = vmax.f32 %v2182, 0.0
    %v2191 = vmax.f32 %v2184, 0.0
    %v2192 = vmax.f32 %v2186, 0.0
    %v2193 = vmax.f32 %v2188, 0.0
    %2194 = vrot.lane.b32.xlu0 %v2190, 127
    %v2195 = vpop.permute.xlu0 %2194
    %2196 = vrot.lane.b32.xlu0 %v2192, 127
    %v2197 = vpop.permute.xlu0 %2196
    %2198 = vrot.lane.b32.xlu0 %v2191, 127
    %v2199 = vpop.permute.xlu0 %2198
    %2200 = vrot.lane.b32.xlu0 %v2193, 127
    %v2201 = vpop.permute.xlu0 %2200
    %v2202 = vsel %vm1132, %v2195, %v2199
    %v2203 = vsel %vm1132, %v2197, %v2201
    %v2204 = vsel %vm1132, %v2199, %v2195
    %v2205 = vsel %vm1132, %v2201, %v2197
    %v2206 = vmax.f32 %v2190, %v2202
    %v2207 = vmax.f32 %v2191, %v2204
    %v2208 = vmax.f32 %v2192, %v2203
    %v2209 = vmax.f32 %v2193, %v2205
    %2210 = vrot.lane.b32.xlu0 %v2206, 120
    %v2211 = vpop.permute.xlu0 %2210
    %2212 = vrot.lane.b32.xlu0 %v2208, 120
    %v2213 = vpop.permute.xlu0 %2212
    %2214 = vrot.lane.b32.xlu0 %v2207, 120
    %v2215 = vpop.permute.xlu0 %2214
    %2216 = vrot.lane.b32.xlu0 %v2209, 120
    %v2217 = vpop.permute.xlu0 %2216
    %vm2218 = vcmp.lt.s32.totalorder %v1131, 120
    %v2219 = vsel %vm2218, %v2211, %v2215
    %v2220 = vsel %vm2218, %v2213, %v2217
    %v2221 = vsel %vm2218, %v2215, %v2211
    %v2222 = vsel %vm2218, %v2217, %v2213
    %v2223 = vmax.f32 %v2206, %v2219
    %v2224 = vmax.f32 %v2207, %v2221
    %v2225 = vmax.f32 %v2208, %v2220
    %v2226 = vmax.f32 %v2209, %v2222
    %v2227 = vpack.c.bf16 %v2225, %v2223
    %v2228 = vpack.c.bf16 %v2226, %v2224
    %v2229 = vld [vmem:[#allocation10] sm:$0xf]
    %v2230 = vld [vmem:[#allocation10 + $0x4] sm:$0xf]
    %v2231 = vld [vmem:[#allocation10 + $0x8] sm:$0xf]
    %v2232 = vld [vmem:[#allocation10 + $0xc] sm:$0xf]
    %v2233 = vld [vmem:[#allocation10 + $0x10] sm:$0xf]
    %v2234 = vld [vmem:[#allocation10 + $0x14] sm:$0xf]
    %v2235 = vld [vmem:[#allocation10 + $0x18] sm:$0xf]
    %v2236 = vld [vmem:[#allocation10 + $0x1c] sm:$0xf]
    %v2237 = vld [vmem:[#allocation10 + $0x20] sm:$0xf]
    %v2238 = vld [vmem:[#allocation10 + $0x24] sm:$0xf]
    %v2239 = vld [vmem:[#allocation10 + $0x28] sm:$0xf]
    %v2240 = vld [vmem:[#allocation10 + $0x2c] sm:$0xf]
    %v2241 = vld [vmem:[#allocation10 + $0x30] sm:$0xf]
    %v2242 = vld [vmem:[#allocation10 + $0x34] sm:$0xf]
    %v2243 = vld [vmem:[#allocation10 + $0x38] sm:$0xf]
    %v2244 = vld [vmem:[#allocation10 + $0x3c] sm:$0xf]
    %v2245 = vld [vmem:[#allocation10 + $0x40] sm:$0xf]
    %v2246 = vld [vmem:[#allocation10 + $0x44] sm:$0xf]
    %v2247 = vld [vmem:[#allocation10 + $0x48] sm:$0xf]
    %v2248 = vld [vmem:[#allocation10 + $0x4c] sm:$0xf]
    %v2249 = vld [vmem:[#allocation10 + $0x50] sm:$0xf]
    %v2250 = vld [vmem:[#allocation10 + $0x54] sm:$0xf]
    %v2251 = vld [vmem:[#allocation10 + $0x58] sm:$0xf]
    %v2252 = vld [vmem:[#allocation10 + $0x5c] sm:$0xf]
    %v2253 = vld [vmem:[#allocation10 + $0x60] sm:$0xf]
    %v2254 = vld [vmem:[#allocation10 + $0x64] sm:$0xf]
    %v2255 = vld [vmem:[#allocation10 + $0x68] sm:$0xf]
    %v2256 = vld [vmem:[#allocation10 + $0x6c] sm:$0xf]
    %v2257 = vld [vmem:[#allocation10 + $0x70] sm:$0xf]
    %v2258 = vld [vmem:[#allocation10 + $0x74] sm:$0xf]
    %v2259 = vld [vmem:[#allocation10 + $0x78] sm:$0xf]
    %v2260 = vld [vmem:[#allocation10 + $0x7c] sm:$0xf]
    %v2261 = vld [vmem:[%s6] sm:$0x1]
    %v2263 = vlaneseq
    %v2264 = vshrl.u32 %v2263, 7
    %v2265 = vsub.s32 0, %v2264
    %v2266 = vrot.slane %v2261, %v2265
    %v2300 = vunpack.c.l.b16 %v2229
    %v2301 = vunpack.c.l.b16 %v2230
    %v2302 = vunpack.c.l.b16 %v2231
    %v2303 = vunpack.c.l.b16 %v2232
    %v2304 = vunpack.c.l.b16 %v2233
    %v2305 = vunpack.c.l.b16 %v2234
    %v2306 = vunpack.c.l.b16 %v2235
    %v2307 = vunpack.c.l.b16 %v2236
    %v2308 = vunpack.c.l.b16 %v2237
    %v2309 = vunpack.c.l.b16 %v2238
    %v2310 = vunpack.c.l.b16 %v2239
    %v2311 = vunpack.c.l.b16 %v2240
    %v2312 = vunpack.c.l.b16 %v2241
    %v2313 = vunpack.c.l.b16 %v2242
    %v2314 = vunpack.c.l.b16 %v2243
    %v2315 = vunpack.c.l.b16 %v2244
    %v2316 = vunpack.c.l.b16 %v2245
    %v2317 = vunpack.c.l.b16 %v2246
    %v2318 = vunpack.c.l.b16 %v2247
    %v2319 = vunpack.c.l.b16 %v2248
    %v2320 = vunpack.c.l.b16 %v2249
    %v2321 = vunpack.c.l.b16 %v2250
    %v2322 = vunpack.c.l.b16 %v2251
    %v2323 = vunpack.c.l.b16 %v2252
    %v2324 = vunpack.c.l.b16 %v2253
    %v2325 = vunpack.c.l.b16 %v2254
    %v2326 = vunpack.c.l.b16 %v2255
    %v2327 = vunpack.c.l.b16 %v2256
    %v2328 = vunpack.c.l.b16 %v2257
    %v2329 = vunpack.c.l.b16 %v2258
    %v2330 = vunpack.c.l.b16 %v2259
    %v2331 = vunpack.c.l.b16 %v2260
    %v2332 = vpack.c.b16 %v2301, %v2300
    %v2333 = vpack.c.b16 %v2303, %v2302
    %v2334 = vpack.c.b16 %v2305, %v2304
    %v2335 = vpack.c.b16 %v2307, %v2306
    %v2336 = vpack.c.b16 %v2309, %v2308
    %v2337 = vpack.c.b16 %v2311, %v2310
    %v2338 = vpack.c.b16 %v2313, %v2312
    %v2339 = vpack.c.b16 %v2315, %v2314
    %v2340 = vpack.c.b16 %v2317, %v2316
    %v2341 = vpack.c.b16 %v2319, %v2318
    %v2342 = vpack.c.b16 %v2321, %v2320
    %v2343 = vpack.c.b16 %v2323, %v2322
    %v2344 = vpack.c.b16 %v2325, %v2324
    %v2345 = vpack.c.b16 %v2327, %v2326
    %v2346 = vpack.c.b16 %v2329, %v2328
    %v2347 = vpack.c.b16 %v2331, %v2330
    %2364 = vmatprep.subr.bf16.mxu0 0
    %2365 = vmatpush1.bf16.msra.mxu0 %v2332
    %2366 = vmatprep.subr.bf16.mxu0 0
    %2367 = vmatpush1.bf16.msra.mxu0 %v2333
    %2368 = vmatprep.subr.bf16.mxu0 0
    %2369 = vmatpush1.bf16.msra.mxu0 %v2334
    %2370 = vmatprep.subr.bf16.mxu0 0
    %2371 = vmatpush1.bf16.msra.mxu0 %v2335
    %2372 = vmatprep.subr.bf16.mxu0 0
    %2373 = vmatpush1.bf16.msra.mxu0 %v2336
    %2374 = vmatprep.subr.bf16.mxu0 0
    %2375 = vmatpush1.bf16.msra.mxu0 %v2337
    %2376 = vmatprep.subr.bf16.mxu0 0
    %2377 = vmatpush1.bf16.msra.mxu0 %v2338
    %2378 = vmatprep.subr.bf16.mxu0 0
    %2379 = vmatpush1.bf16.msra.mxu0 %v2339
    %2380 = vmatprep.subr.bf16.mxu0 0
    %2381 = vmatpush1.bf16.msra.mxu0 %v2340
    %2382 = vmatprep.subr.bf16.mxu0 0
    %2383 = vmatpush1.bf16.msra.mxu0 %v2341
    %2384 = vmatprep.subr.bf16.mxu0 0
    %2385 = vmatpush1.bf16.msra.mxu0 %v2342
    %2386 = vmatprep.subr.bf16.mxu0 0
    %2387 = vmatpush1.bf16.msra.mxu0 %v2343
    %2388 = vmatprep.subr.bf16.mxu0 0
    %2389 = vmatpush1.bf16.msra.mxu0 %v2344
    %2390 = vmatprep.subr.bf16.mxu0 0
    %2391 = vmatpush1.bf16.msra.mxu0 %v2345
    %2392 = vmatprep.subr.bf16.mxu0 0
    %2393 = vmatpush1.bf16.msra.mxu0 %v2346
    %2394 = vmatprep.subr.bf16.mxu0 0
    %2395 = vmatpush1.bf16.msra.mxu0 %v2347
    %2396 = vmatprep.mubr.bf16.mxu0 %v2228
    %2397 = vmatmul.mubr.bf16.gmra.mrb[0].mxu0 %v2227
    %v2398 = vpop.f32.mrb[0].mxu0
    %v2399 = vadd.f32 %v2266, %v2398
    %v2400 = vpop.f32.mrb[0].mxu0
    %v2401 = vpop.f32.mrb[0].mxu0
    %v2402 = vadd.f32 %v2266, %v2401
    %v2403 = vpop.f32.mrb[0].mxu0
    %2404 = vdwg.mxu0
    %2405 = vmax.xlane.f32.xlu0 %v2399
    %v2406 = vpop.xlane.xlu0 %2405
    %2407 = vmax.xlane.f32.xlu0 %v2402
    %v2408 = vpop.xlane.xlu0 %2407
    %v2409 = vsub.f32 %v2399, %v2406
    %v2410 = vsub.f32 %v2402, %v2408
    %v2411 = vmul.f32 %v2409, 1.442695
    %v2412 = vpow.pop %v2411
    %v2413 = vmul.f32 %v2410, 1.442695
    %v2414 = vpow.pop %v2413
    %2415 = vadd.xlane.f32.xlu0 %v2412
    %v2416 = vpop.xlane.xlu0 %2415
    %2417 = vadd.xlane.f32.xlu0 %v2414
    %v2418 = vpop.xlane.xlu0 %2417
    %v2419 = vlog2.pop %v2416
    %v2420 = vmul.f32 %v2419, 0.6931472
    %v2421 = vlog2.pop %v2418
    %v2422 = vmul.f32 %v2421, 0.6931472
    %v2423 = vsub.f32 %v2409, %v2420
    %v2424 = vsub.f32 %v2410, %v2422
    %2425 = vst [vmem:[#allocation11] sm:$0xff] %v2423
    %2426 = vst [vmem:[#allocation11 + $0x8] sm:$0xff] %v2424
    // Predicated region
    $region50: #{tpu_custom_call.1} parent=1 // pred_check
      _
    $region51: #{tpu_custom_call.1} parent=1 // pred_check_branch
      %2428 = sbr.rel (0) target = $region53
    $region52: #{tpu_custom_call.1} parent=1 // pred_region
      %s2430 = ssub.s32 256, 256
      %2431 = vsyncadd [#allocation4], %s2430
      %s2432 = sshll.u32 [#allocation11], 4
      %s2433 = int_to_ptr.vmem [resolvable:$true] %s2432
      %2438 = dma.vmem_to_hbm [thread:$0]  %s2433, 256, %s7, [#allocation4], 128, 128, 8
    $region53: #{tpu_custom_call.1} parent=1 // pred_fallthru
      _
    // Predicated region
    $region54: #{tpu_custom_call.1} parent=1 // pred_check
      _
    $region55: #{tpu_custom_call.1} parent=1 // pred_check_branch
      %2440 = sbr.rel (0) target = $region57
    $region56: #{tpu_custom_call.1} parent=1 // pred_region
      %2441 = dma.done [#allocation4], 256
    $region57: #{tpu_custom_call.1} parent=1 // pred_fallthru
      _
    %2442 = vsyncpa [#allocation3], 1
    %2443 = vsyncpa [#allocation6], 1
    %2444 = vsyncpa [#allocation9], 1
    %2445 = vsyncpa [#allocation4], 1

</llo_original>
